<compile_context>
chip_gen: v5e
topology: v5e:2x2
jax: 0.10.0
libtpu: 0.0.40
codegen_flags: <defaults>
</compile_context>

<pallas_src>
import functools
import math

import jax
import jax.numpy as jnp
from jax import lax
from jax.experimental import pallas as pl
from jax.experimental.pallas import tpu as pltpu

EPS = 1e-5
NEG_SLOPE = 0.1


def _leaky(x):
    return jnp.where(x > 0, x, NEG_SLOPE * x)


def _round_up(x, m):
    return (x + m - 1) // m * m


def _vmem_budget_bytes():
    # Generation-aware scoped-VMEM budget: ~3/4 of physical, capped at 96 MiB
    # (v5e/v6e: 128 MiB physical -> 96 MiB; v7x: 64 MiB physical -> 48 MiB).
    try:
        cap = int(pltpu.get_tpu_info().vmem_capacity_bytes)
    except Exception:
        cap = 64 * 1024 * 1024
    return int(min(cap * 3 // 4, 96 * 1024 * 1024))


def _pick_pixel_tile(Pa, per_lane_bytes, budget_bytes):
    """Largest 128-multiple tile that divides Pa and fits the VMEM budget."""
    cap_lanes = max(budget_bytes // max(per_lane_bytes, 1), 128)
    cap_lanes = min(cap_lanes, 16384)
    q = Pa // 128
    best = 128
    for d in range(1, q + 1):
        if q % d == 0 and 128 * d <= cap_lanes:
            best = 128 * d
    return best


def _pick_row_tile(H, W):
    """Smallest TH such that TH*W is a multiple of 128 and TH divides H."""
    base = 128 // math.gcd(W, 128)
    t = base
    while t <= H:
        if H % t == 0:
            return t
        t += base
    return H  # whole-(padded)-image fallback


# --------------- pass A: 1x1 conv + partial BN1 statistics ---------------
def _conv1_stats_kernel(x_ref, w1_ref, h_ref, s_ref):
    # x_ref: (C, TPA) f32   w1_ref: (Cmid, C)   h_ref: (Cmid, TPA)   s_ref: (Cmid, 2) f32
    x = x_ref[...].astype(w1_ref.dtype)
    h = jnp.dot(w1_ref[...], x, preferred_element_type=jnp.float32)
    h_ref[...] = h.astype(h_ref.dtype)
    # partial sums for training-mode BN (padding pixels are zero -> harmless)
    s_ref[:, 0:1] = jnp.sum(h, axis=1, keepdims=True)
    s_ref[:, 1:2] = jnp.sum(h * h, axis=1, keepdims=True)


# ------ pass B: BN1 affine + leaky + 3x3 conv + partial BN2 statistics ------
def _bn1_conv3_stats_kernel(hm_ref, hp_ref, hn_ref, w2_ref, sc1_ref, sh1_ref,
                            a_ref, s_ref, *, W, P):
    # hm/hp/hn: (Cmid, TPB) pre-BN 1x1 activations of the current / previous /
    #           next row tile (index maps clamped at the image edges).
    # w2_ref:   (C, 9*Cmid) conv weights, taps stacked along the contraction.
    # sc1/sh1:  (Cmid, 1) folded BN1 scale/shift.
    # a_ref:    (C, TPB) pre-BN2 conv output.   s_ref: (C, 2) partial stats.
    r = pl.program_id(1)
    n_rows = pl.num_programs(1)
    Cmid, TPB = hm_ref.shape
    mdt = w2_ref.dtype

    sc1 = sc1_ref[...]
    sh1 = sh1_ref[...]

    def act(v):  # BN1 affine + leaky (recomputed on halo rows, per review)
        v = v.astype(jnp.float32) * sc1 + sh1
        return jnp.where(v > 0, v, NEG_SLOPE * v)

    # Tiles are row-aligned, so column(p) = p % W.  Masks hoisted to (1, TPB).
    lane = lax.broadcasted_iota(jnp.int32, (1, TPB), 1)
    valid = (r * TPB + lane) < P          # non-trivial only in the whole-image
    col = lane % W                        # fallback (tile includes 128-padding)
    has_left = col > 0
    has_right = col < (W - 1)

    h = jnp.where(valid, act(hm_ref[...]), 0.0).astype(mdt)
    # Halo rows: last row of previous tile / first row of next tile; the conv's
    # zero padding applies *after* BN1+leaky, so image-boundary halos are zero.
    top = jnp.where(r > 0, act(hp_ref[:, pl.ds(TPB - W, W)]), 0.0).astype(mdt)
    bot = jnp.where(r < n_rows - 1, act(hn_ref[:, pl.ds(0, W)]), 0.0).astype(mdt)

    # Vertical +/-1-row taps: one row-level concat + two lane slices.
    ext = jnp.concatenate([top, h, bot], axis=1)   # (Cmid, TPB + 2W)
    up = ext[:, :TPB]                              # in[y-1, x]
    down = ext[:, 2 * W:]                          # in[y+1, x]

    # Horizontal +/-1-column taps: lane roll (XLU) + hoisted edge masks.  The
    # wrapped / row-crossing lanes are exactly the masked ones.
    def taps(src):
        left = jnp.where(has_left, pltpu.roll(src, 1, axis=1),
                         jnp.zeros_like(src))
        right = jnp.where(has_right, pltpu.roll(src, TPB - 1, axis=1),
                          jnp.zeros_like(src))
        return [left, src, right]

    # Stack the 9 taps along channels -> single dot, contraction depth 9*Cmid.
    stacked = jnp.concatenate(taps(up) + taps(h) + taps(down), axis=0)
    acc = jnp.dot(w2_ref[...], stacked, preferred_element_type=jnp.float32)
    acc = jnp.where(valid, acc, 0.0)

    a_ref[...] = acc.astype(a_ref.dtype)
    s_ref[:, 0:1] = jnp.sum(acc, axis=1, keepdims=True)
    s_ref[:, 1:2] = jnp.sum(acc * acc, axis=1, keepdims=True)


# ------------- pass C: BN2 affine + residual add + leaky -------------
def _bn2_residual_kernel(a_ref, x_ref, sc2_ref, sh2_ref, o_ref):
    out = a_ref[...].astype(jnp.float32) * sc2_ref[...] + sh2_ref[...] + x_ref[...]
    o_ref[...] = _leaky(out).astype(o_ref.dtype)


def _fold_bn(partial_stats, gamma, beta, count):
    """Fold per-tile (sum, sumsq) into per-channel scale/shift columns."""
    ck = partial_stats.shape[-2]
    tot = partial_stats.reshape(-1, ck, 2).sum(axis=0)
    mean = tot[:, 0] / count
    var = jnp.maximum(tot[:, 1] / count - mean * mean, 0.0)  # biased variance
    scale = gamma * lax.rsqrt(var + EPS)
    shift = beta - mean * scale
    return scale[:, None].astype(jnp.float32), shift[:, None].astype(jnp.float32)


@functools.partial(jax.jit, static_argnames=("matmul_dtype",))
def residual_block(x_nchw, params, *, matmul_dtype=jnp.bfloat16):
    """PyTorch-compatible entry: x is NCHW f32, returns NCHW f32."""
    N, C, H, W = x_nchw.shape
    Cmid = C // 2
    P = H * W
    Pa = _round_up(P, 128)
    mdtb = jnp.dtype(matmul_dtype).itemsize

    budget = _vmem_budget_bytes()
    tpa = _pick_pixel_tile(Pa, 2 * (C * 4 + Cmid * mdtb), budget // 2)
    tpc = _pick_pixel_tile(Pa, 2 * (C * mdtb + 2 * C * 4), budget // 2)
    TH = _pick_row_tile(H, W)
    TPB = Pa if TH == H else TH * W
    nBT = H // TH
    nA = Pa // tpa
    nC = Pa // tpc

    # NCHW is already channel-major: the reshape is free.  Zero-pad the pixel
    # axis to a multiple of 128 so every tile is lane-dense at any resolution.
    x = x_nchw.reshape(N, C, P).astype(jnp.float32)
    if Pa != P:
        x = jnp.pad(x, ((0, 0), (0, 0), (0, Pa - P)))

    w1 = params["w1"][:, :, 0, 0].astype(matmul_dtype)                   # (Cmid, C)
    # (C, Cmid, 3, 3) -> (C, ky, kx, Cmid) -> (C, 9*Cmid), tap order ky*3+kx.
    w2 = jnp.transpose(params["w2"], (0, 2, 3, 1)).reshape(C, 9 * Cmid)
    w2 = w2.astype(matmul_dtype)
    # conv biases dropped: training-mode BN mean subtraction cancels them.

    cparams = pltpu.CompilerParams(
        dimension_semantics=("parallel", "parallel"),
        vmem_limit_bytes=budget)

    # ---- pass A ----
    h_pre, stats1 = pl.pallas_call(
        _conv1_stats_kernel,
        grid=(N, nA),
        in_specs=[
            pl.BlockSpec((None, C, tpa), lambda n, p: (n, 0, p)),
            pl.BlockSpec((Cmid, C), lambda n, p: (0, 0)),
        ],
        out_specs=[
            pl.BlockSpec((None, Cmid, tpa), lambda n, p: (n, 0, p)),
            pl.BlockSpec((None, None, Cmid, 2), lambda n, p: (n, p, 0, 0)),
        ],
        out_shape=[
            jax.ShapeDtypeStruct((N, Cmid, Pa), matmul_dtype),
            jax.ShapeDtypeStruct((N, nA, Cmid, 2), jnp.float32),
        ],
        compiler_params=cparams,
    )(x, w1)

    scale1, shift1 = _fold_bn(stats1, params["g1"], params["be1"], N * P)

    # ---- pass B (row-tiled with halos from neighbouring row blocks) ----
    a_pre, stats2 = pl.pallas_call(
        functools.partial(_bn1_conv3_stats_kernel, W=W, P=P),
        grid=(N, nBT),
        in_specs=[
            pl.BlockSpec((None, Cmid, TPB), lambda n, r: (n, 0, r)),
            pl.BlockSpec((None, Cmid, TPB),
                         lambda n, r: (n, 0, jnp.maximum(r - 1, 0))),
            pl.BlockSpec((None, Cmid, TPB),
                         lambda n, r: (n, 0, jnp.minimum(r + 1, nBT - 1))),
            pl.BlockSpec((C, 9 * Cmid), lambda n, r: (0, 0)),
            pl.BlockSpec((Cmid, 1), lambda n, r: (0, 0)),
            pl.BlockSpec((Cmid, 1), lambda n, r: (0, 0)),
        ],
        out_specs=[
            pl.BlockSpec((None, C, TPB), lambda n, r: (n, 0, r)),
            pl.BlockSpec((None, None, C, 2), lambda n, r: (n, r, 0, 0)),
        ],
        out_shape=[
            jax.ShapeDtypeStruct((N, C, Pa), matmul_dtype),
            jax.ShapeDtypeStruct((N, nBT, C, 2), jnp.float32),
        ],
        compiler_params=cparams,
    )(h_pre, h_pre, h_pre, w2, scale1, shift1)

    scale2, shift2 = _fold_bn(stats2, params["g2"], params["be2"], N * P)

    # ---- pass C ----
    out = pl.pallas_call(
        _bn2_residual_kernel,
        grid=(N, nC),
        in_specs=[
            pl.BlockSpec((None, C, tpc), lambda n, p: (n, 0, p)),
            pl.BlockSpec((None, C, tpc), lambda n, p: (n, 0, p)),
            pl.BlockSpec((C, 1), lambda n, p: (0, 0)),
            pl.BlockSpec((C, 1), lambda n, p: (0, 0)),
        ],
        out_specs=pl.BlockSpec((None, C, tpc), lambda n, p: (n, 0, p)),
        out_shape=jax.ShapeDtypeStruct((N, C, Pa), jnp.float32),
        compiler_params=cparams,
    )(a_pre, x, scale2, shift2)

    return out[:, :, :P].reshape(N, C, H, W)


def init_params(key, channels):
    """Deterministic synthetic parameters matching ResidualBlock(channels)."""
    cmid = channels // 2
    ks = jax.random.split(key, 8)
    return dict(
        w1=0.2 * jax.random.normal(ks[0], (cmid, channels, 1, 1), jnp.float32),
        b1=0.1 * jax.random.normal(ks[1], (cmid,), jnp.float32),
        w2=0.2 * jax.random.normal(ks[2], (channels, cmid, 3, 3), jnp.float32),
        b2=0.1 * jax.random.normal(ks[3], (channels,), jnp.float32),
        g1=1.0 + 0.1 * jax.random.normal(ks[4], (cmid,), jnp.float32),
        be1=0.1 * jax.random.normal(ks[5], (cmid,), jnp.float32),
        g2=1.0 + 0.1 * jax.random.normal(ks[6], (channels,), jnp.float32),
        be2=0.1 * jax.random.normal(ks[7], (channels,), jnp.float32),
    )


def reference(x, p):
    """Pure-JAX replica of the PyTorch forward (training-mode BN, with biases)."""
    N, C, H, W = x.shape
    w1 = p["w1"][:, :, 0, 0]
    h = jnp.einsum("nchw,dc->ndhw", x, w1) + p["b1"][None, :, None, None]
    m = h.mean(axis=(0, 2, 3), keepdims=True)
    v = ((h - m) ** 2).mean(axis=(0, 2, 3), keepdims=True)
    h = (h - m) / jnp.sqrt(v + EPS) * p["g1"][None, :, None, None] \
        + p["be1"][None, :, None, None]
    h = _leaky(h)
    hp = jnp.pad(h, ((0, 0), (0, 0), (1, 1), (1, 1)))
    out = jnp.zeros((N, C, H, W), jnp.float32) + p["b2"][None, :, None, None]
    for ky in range(3):
        for kx in range(3):
            out = out + jnp.einsum("ndhw,cd->nchw",
                                   hp[:, :, ky:ky + H, kx:kx + W],
                                   p["w2"][:, :, ky, kx])
    m = out.mean(axis=(0, 2, 3), keepdims=True)
    v = ((out - m) ** 2).mean(axis=(0, 2, 3), keepdims=True)
    out = (out - m) / jnp.sqrt(v + EPS) * p["g2"][None, :, None, None] \
        + p["be2"][None, :, None, None]
    return _leaky(out + x)


if __name__ == "__main__":
    key = jax.random.PRNGKey(0)
    k_x, k_p = jax.random.split(key)

    N, C, H, W = 2, 4, 16, 16  # x: [2, 4, 16, 16] NCHW, like the PyTorch module
    x = jax.random.normal(k_x, (N, C, H, W), jnp.float32)
    params = init_params(k_p, C)

    y_ref = jax.block_until_ready(reference(x, params))

    # Exact-semantics path (f32 matmul operands): tight tolerance.
    y32 = jax.block_until_ready(residual_block(x, params, matmul_dtype=jnp.float32))
    assert y32.shape == (N, C, H, W)
    assert jnp.allclose(y32, y_ref, rtol=1e-3, atol=1e-3), (
        float(jnp.max(jnp.abs(y32 - y_ref))))

    # bf16 matmul-operand path (MXU rate, half the intermediate HBM traffic);
    # all BN / elementwise math stays in f32.
    ybf = jax.block_until_ready(residual_block(x, params, matmul_dtype=jnp.bfloat16))
    assert ybf.shape == (N, C, H, W)
    assert jnp.allclose(ybf, y_ref, rtol=5e-2, atol=5e-2), (
        float(jnp.max(jnp.abs(ybf - y_ref))))

    print("KERNEL_OK")
</pallas_src>

<mosaic_0001>
module attributes {stable_mosaic.version = 11 : i64} {
  func.func @_conv1_stats_kernel(%arg0: i32, %arg1: i32, %arg2: memref<1x4x256xf32, #tpu.memory_space<vmem>>, %arg3: memref<2x4xf32, #tpu.memory_space<vmem>>, %arg4: memref<1x2x256xf32, #tpu.memory_space<vmem>>, %arg5: memref<1x1x2x2xf32, #tpu.memory_space<vmem>>) attributes {dimension_semantics = [#tpu.dimension_semantics<parallel>, #tpu.dimension_semantics<parallel>], iteration_bounds = array<i64: 2, 1>, scalar_prefetch = 0 : i64, scratch_operands = 0 : i64, tpu.core_type = #tpu.core_type<tc>, window_params = [{transform_indices = @transform_0, window_bounds = array<i64: 1, 4, 256>}, {pipeline_mode = #tpu.pipeline_mode<synchronous>, transform_indices = @transform_1, window_bounds = array<i64: 2, 4>}, {transform_indices = @transform_2, window_bounds = array<i64: 1, 2, 256>}, {transform_indices = @transform_3, window_bounds = array<i64: 1, 1, 2, 2>}]} {
    %c0 = arith.constant 0 : index
    %c0_0 = arith.constant 0 : index
    %c0_1 = arith.constant 0 : index
    %0 = vector.load %arg2[%c0, %c0_0, %c0_1] : memref<1x4x256xf32, #tpu.memory_space<vmem>>, vector<1x4x256xf32>
    %1 = vector.shape_cast %0 : vector<1x4x256xf32> to vector<4x256xf32>
    %c0_2 = arith.constant 0 : index
    %c0_3 = arith.constant 0 : index
    %2 = vector.load %arg3[%c0_2, %c0_3] : memref<2x4xf32, #tpu.memory_space<vmem>>, vector<2x4xf32>
    %cst = arith.constant dense<0.000000e+00> : vector<2x256xf32>
    %3 = tpu.matmul %2, %1, %cst {dimension_numbers = #tpu.dot_dimension_numbers<[1], [0], [0], [1], [0, 0, 1, 1], [], []>} : vector<2x4xf32>, vector<4x256xf32>, vector<2x256xf32> -> vector<2x256xf32>
    %c0_4 = arith.constant 0 : index
    %c0_5 = arith.constant 0 : index
    %c0_6 = arith.constant 0 : index
    %4 = vector.load %arg4[%c0_4, %c0_5, %c0_6] : memref<1x2x256xf32, #tpu.memory_space<vmem>>, vector<1x2x256xf32>
    %5 = vector.shape_cast %4 : vector<1x2x256xf32> to vector<2x256xf32>
    %6 = vector.shape_cast %3 : vector<2x256xf32> to vector<1x2x256xf32>
    tpu.vector_store %arg4[%c0_4, %c0_5, %c0_6], %6 {strides = array<i32>} : memref<1x2x256xf32, #tpu.memory_space<vmem>>, vector<1x2x256xf32>,
    %cst_7 = arith.constant dense<0.000000e+00> : vector<2xf32>
    %7 = vector.multi_reduction <add>, %3, %cst_7 [1] : vector<2x256xf32> to vector<2xf32>
    %8 = vector.shape_cast %7 : vector<2xf32> to vector<2x1xf32>
    %c0_8 = arith.constant 0 : index
    %c0_9 = arith.constant 0 : index
    %c0_10 = arith.constant 0 : index
    %c0_11 = arith.constant 0 : index
    %9 = vector.load %arg5[%c0_8, %c0_9, %c0_10, %c0_11] : memref<1x1x2x2xf32, #tpu.memory_space<vmem>>, vector<1x1x2x1xf32>
    %10 = vector.shape_cast %9 : vector<1x1x2x1xf32> to vector<2x1xf32>
    %11 = vector.shape_cast %8 : vector<2x1xf32> to vector<1x1x2x1xf32>
    tpu.vector_store %arg5[%c0_8, %c0_9, %c0_10, %c0_11], %11 {strides = array<i32>} : memref<1x1x2x2xf32, #tpu.memory_space<vmem>>, vector<1x1x2x1xf32>,
    %12 = arith.mulf %3, %3 : vector<2x256xf32>
    %cst_12 = arith.constant dense<0.000000e+00> : vector<2xf32>
    %13 = vector.multi_reduction <add>, %12, %cst_12 [1] : vector<2x256xf32> to vector<2xf32>
    %14 = vector.shape_cast %13 : vector<2xf32> to vector<2x1xf32>
    %c0_13 = arith.constant 0 : index
    %c0_14 = arith.constant 0 : index
    %c0_15 = arith.constant 0 : index
    %c1 = arith.constant 1 : index
    %15 = vector.load %arg5[%c0_13, %c0_14, %c0_15, %c1] : memref<1x1x2x2xf32, #tpu.memory_space<vmem>>, vector<1x1x2x1xf32>
    %16 = vector.shape_cast %15 : vector<1x1x2x1xf32> to vector<2x1xf32>
    %17 = vector.shape_cast %14 : vector<2x1xf32> to vector<1x1x2x1xf32>
    tpu.vector_store %arg5[%c0_13, %c0_14, %c0_15, %c1], %17 {strides = array<i32>} : memref<1x1x2x2xf32, #tpu.memory_space<vmem>>, vector<1x1x2x1xf32>,
    return
  }
  func.func @transform_0(%arg0: i32, %arg1: i32) -> (i32, i32, i32) {
    %c0_i32 = arith.constant 0 : i32
    %c0_i32_0 = arith.constant 0 : i32
    return %arg0, %c0_i32, %arg1 : i32, i32, i32
  }
  func.func @transform_1(%arg0: i32, %arg1: i32) -> (i32, i32) {
    %c0_i32 = arith.constant 0 : i32
    %c0_i32_0 = arith.constant 0 : i32
    %c0_i32_1 = arith.constant 0 : i32
    return %c0_i32, %c0_i32_0 : i32, i32
  }
  func.func @transform_2(%arg0: i32, %arg1: i32) -> (i32, i32, i32) {
    %c0_i32 = arith.constant 0 : i32
    %c0_i32_0 = arith.constant 0 : i32
    return %arg0, %c0_i32, %arg1 : i32, i32, i32
  }
  func.func @transform_3(%arg0: i32, %arg1: i32) -> (i32, i32, i32, i32) {
    %c0_i32 = arith.constant 0 : i32
    %c0_i32_0 = arith.constant 0 : i32
    %c0_i32_1 = arith.constant 0 : i32
    return %arg0, %arg1, %c0_i32, %c0_i32_0 : i32, i32, i32, i32
  }
}

module attributes {stable_mosaic.version = 11 : i64} {
  func.func @_bn1_conv3_stats_kernel(%arg0: i32, %arg1: i32, %arg2: memref<1x2x128xf32, #tpu.memory_space<vmem>>, %arg3: memref<1x2x128xf32, #tpu.memory_space<vmem>>, %arg4: memref<1x2x128xf32, #tpu.memory_space<vmem>>, %arg5: memref<4x18xf32, #tpu.memory_space<vmem>>, %arg6: memref<2x1xf32, #tpu.memory_space<vmem>>, %arg7: memref<2x1xf32, #tpu.memory_space<vmem>>, %arg8: memref<1x4x128xf32, #tpu.memory_space<vmem>>, %arg9: memref<1x1x4x2xf32, #tpu.memory_space<vmem>>) attributes {dimension_semantics = [#tpu.dimension_semantics<parallel>, #tpu.dimension_semantics<parallel>], iteration_bounds = array<i64: 2, 2>, scalar_prefetch = 0 : i64, scratch_operands = 0 : i64, tpu.core_type = #tpu.core_type<tc>, window_params = [{transform_indices = @transform_0, window_bounds = array<i64: 1, 2, 128>}, {transform_indices = @transform_1, window_bounds = array<i64: 1, 2, 128>}, {transform_indices = @transform_2, window_bounds = array<i64: 1, 2, 128>}, {pipeline_mode = #tpu.pipeline_mode<synchronous>, transform_indices = @transform_3, window_bounds = array<i64: 4, 18>}, {pipeline_mode = #tpu.pipeline_mode<synchronous>, transform_indices = @transform_4, window_bounds = array<i64: 2, 1>}, {pipeline_mode = #tpu.pipeline_mode<synchronous>, transform_indices = @transform_5, window_bounds = array<i64: 2, 1>}, {transform_indices = @transform_6, window_bounds = array<i64: 1, 4, 128>}, {transform_indices = @transform_7, window_bounds = array<i64: 1, 1, 4, 2>}]} {
    %c0 = arith.constant 0 : index
    %c0_0 = arith.constant 0 : index
    %0 = vector.load %arg6[%c0, %c0_0] : memref<2x1xf32, #tpu.memory_space<vmem>>, vector<2x1xf32>
    %c0_1 = arith.constant 0 : index
    %c0_2 = arith.constant 0 : index
    %1 = vector.load %arg7[%c0_1, %c0_2] : memref<2x1xf32, #tpu.memory_space<vmem>>, vector<2x1xf32>
    %2 = tpu.iota {dimensions = array<i32: 1>} : vector<1x128xi32>
    %c128_i32 = arith.constant 128 : i32
    %3 = arith.muli %arg1, %c128_i32 : i32
    %4 = vector.broadcast %3 : i32 to vector<1x128xi32>
    %5 = arith.addi %4, %2 : vector<1x128xi32>
    %c256_i32 = arith.constant 256 : i32
    %6 = vector.broadcast %c256_i32 : i32 to vector<1x128xi32>
    %7 = arith.cmpi slt, %5, %6 : vector<1x128xi32>
    %c16_i32 = arith.constant 16 : i32
    %c0_i32 = arith.constant 0 : i32
    %8 = arith.cmpi eq, %c16_i32, %c0_i32 : i32
    %c1_i32 = arith.constant 1 : i32
    %9 = arith.select %8, %c1_i32, %c16_i32 : i32
    %10 = vector.broadcast %9 : i32 to vector<1x128xi32>
    %11 = arith.remsi %2, %10 : vector<1x128xi32>
    %c0_i32_3 = arith.constant 0 : i32
    %12 = vector.broadcast %c0_i32_3 : i32 to vector<1x128xi32>
    %13 = arith.cmpi ne, %11, %12 : vector<1x128xi32>
    %c0_i32_4 = arith.constant 0 : i32
    %14 = vector.broadcast %c0_i32_4 : i32 to vector<1x128xi32>
    %15 = arith.cmpi slt, %11, %14 : vector<1x128xi32>
    %c0_i32_5 = arith.constant 0 : i32
    %16 = arith.cmpi slt, %9, %c0_i32_5 : i32
    %17 = vector.broadcast %16 : i1 to vector<1x128xi1>
    %18 = vector.broadcast %17 : vector<1x128xi1> to vector<1x128xi1>
    %19 = arith.xori %15, %18 : vector<1x128xi1>
    %20 = arith.andi %19, %13 : vector<1x128xi1>
    %21 = vector.broadcast %9 : i32 to vector<1x128xi32>
    %22 = arith.addi %11, %21 : vector<1x128xi32>
    %23 = arith.select %20, %22, %11 : vector<1x128xi1>, vector<1x128xi32>
    %c0_i32_6 = arith.constant 0 : i32
    %24 = vector.broadcast %c0_i32_6 : i32 to vector<1x128xi32>
    %25 = arith.cmpi sgt, %23, %24 : vector<1x128xi32>
    %c15_i32 = arith.constant 15 : i32
    %26 = vector.broadcast %c15_i32 : i32 to vector<1x128xi32>
    %27 = arith.cmpi slt, %23, %26 : vector<1x128xi32>
    %c0_7 = arith.constant 0 : index
    %c0_8 = arith.constant 0 : index
    %c0_9 = arith.constant 0 : index
    %28 = vector.load %arg2[%c0_7, %c0_8, %c0_9] : memref<1x2x128xf32, #tpu.memory_space<vmem>>, vector<1x2x128xf32>
    %29 = vector.shape_cast %28 : vector<1x2x128xf32> to vector<2x128xf32>
    %30 = vector.broadcast %0 : vector<2x1xf32> to vector<2x128xf32>
    %31 = arith.mulf %29, %30 : vector<2x128xf32>
    %32 = vector.broadcast %1 : vector<2x1xf32> to vector<2x128xf32>
    %33 = arith.addf %31, %32 : vector<2x128xf32>
    %cst = arith.constant 0.000000e+00 : f32
    %34 = vector.broadcast %cst : f32 to vector<2x128xf32>
    %35 = arith.cmpf ogt, %33, %34 : vector<2x128xf32>
    %cst_10 = arith.constant 1.000000e-01 : f32
    %36 = vector.broadcast %cst_10 : f32 to vector<2x128xf32>
    %37 = arith.mulf %36, %33 : vector<2x128xf32>
    %38 = arith.select %35, %33, %37 : vector<2x128xi1>, vector<2x128xf32>
    %cst_11 = arith.constant 0.000000e+00 : f32
    %39 = vector.shape_cast %7 : vector<1x128xi1> to vector<1x128xi1>
    %40 = vector.broadcast %39 : vector<1x128xi1> to vector<2x128xi1>
    %41 = vector.broadcast %cst_11 : f32 to vector<2x128xf32>
    %42 = arith.select %40, %38, %41 : vector<2x128xi1>, vector<2x128xf32>
    %c0_i32_12 = arith.constant 0 : i32
    %43 = arith.cmpi sgt, %arg1, %c0_i32_12 : i32
    %c0_13 = arith.constant 0 : index
    %c0_14 = arith.constant 0 : index
    %c112 = arith.constant 112 : index
    %44 = vector.load %arg3[%c0_13, %c0_14, %c112] : memref<1x2x128xf32, #tpu.memory_space<vmem>>, vector<1x2x16xf32>
    %45 = vector.shape_cast %44 : vector<1x2x16xf32> to vector<2x16xf32>
    %46 = vector.broadcast %0 : vector<2x1xf32> to vector<2x16xf32>
    %47 = arith.mulf %45, %46 : vector<2x16xf32>
    %48 = vector.broadcast %1 : vector<2x1xf32> to vector<2x16xf32>
    %49 = arith.addf %47, %48 : vector<2x16xf32>
    %cst_15 = arith.constant 0.000000e+00 : f32
    %50 = vector.broadcast %cst_15 : f32 to vector<2x16xf32>
    %51 = arith.cmpf ogt, %49, %50 : vector<2x16xf32>
    %cst_16 = arith.constant 1.000000e-01 : f32
    %52 = vector.broadcast %cst_16 : f32 to vector<2x16xf32>
    %53 = arith.mulf %52, %49 : vector<2x16xf32>
    %54 = arith.select %51, %49, %53 : vector<2x16xi1>, vector<2x16xf32>
    %cst_17 = arith.constant 0.000000e+00 : f32
    %55 = vector.broadcast %cst_17 : f32 to vector<2x16xf32>
    %56 = arith.select %43, %54, %55 : vector<2x16xf32>
    %c1_i32_18 = arith.constant 1 : i32
    %57 = arith.cmpi slt, %arg1, %c1_i32_18 : i32
    %c0_19 = arith.constant 0 : index
    %c0_20 = arith.constant 0 : index
    %c0_21 = arith.constant 0 : index
    %58 = vector.load %arg4[%c0_19, %c0_20, %c0_21] : memref<1x2x128xf32, #tpu.memory_space<vmem>>, vector<1x2x16xf32>
    %59 = vector.shape_cast %58 : vector<1x2x16xf32> to vector<2x16xf32>
    %60 = vector.broadcast %0 : vector<2x1xf32> to vector<2x16xf32>
    %61 = arith.mulf %59, %60 : vector<2x16xf32>
    %62 = vector.broadcast %1 : vector<2x1xf32> to vector<2x16xf32>
    %63 = arith.addf %61, %62 : vector<2x16xf32>
    %cst_22 = arith.constant 0.000000e+00 : f32
    %64 = vector.broadcast %cst_22 : f32 to vector<2x16xf32>
    %65 = arith.cmpf ogt, %63, %64 : vector<2x16xf32>
    %cst_23 = arith.constant 1.000000e-01 : f32
    %66 = vector.broadcast %cst_23 : f32 to vector<2x16xf32>
    %67 = arith.mulf %66, %63 : vector<2x16xf32>
    %68 = arith.select %65, %63, %67 : vector<2x16xi1>, vector<2x16xf32>
    %cst_24 = arith.constant 0.000000e+00 : f32
    %69 = vector.broadcast %cst_24 : f32 to vector<2x16xf32>
    %70 = arith.select %57, %68, %69 : vector<2x16xf32>
    %71 = tpu.concatenate %56, %42, %70 in 1 : vector<2x16xf32>, vector<2x128xf32>, vector<2x16xf32> -> vector<2x160xf32>
    %72 = vector.extract_strided_slice %71 {offsets = [0, 0], sizes = [2, 128], strides = [1, 1]} : vector<2x160xf32> to vector<2x128xf32>
    %73 = vector.extract_strided_slice %71 {offsets = [0, 32], sizes = [2, 128], strides = [1, 1]} : vector<2x160xf32> to vector<2x128xf32>
    %c1_i32_25 = arith.constant 1 : i32
    %74 = tpu.dynamic_rotate %72 by %c1_i32_25 dim 1 : vector<2x128xf32>, i32 -> vector<2x128xf32>
    %cst_26 = arith.constant 0.000000e+00 : f32
    %75 = vector.broadcast %cst_26 : f32 to vector<2x128xf32>
    %76 = vector.shape_cast %25 : vector<1x128xi1> to vector<1x128xi1>
    %77 = vector.broadcast %76 : vector<1x128xi1> to vector<2x128xi1>
    %78 = arith.select %77, %74, %75 : vector<2x128xi1>, vector<2x128xf32>
    %c127_i32 = arith.constant 127 : i32
    %79 = tpu.dynamic_rotate %72 by %c127_i32 dim 1 : vector<2x128xf32>, i32 -> vector<2x128xf32>
    %cst_27 = arith.constant 0.000000e+00 : f32
    %80 = vector.broadcast %cst_27 : f32 to vector<2x128xf32>
    %81 = vector.shape_cast %27 : vector<1x128xi1> to vector<1x128xi1>
    %82 = vector.broadcast %81 : vector<1x128xi1> to vector<2x128xi1>
    %83 = arith.select %82, %79, %80 : vector<2x128xi1>, vector<2x128xf32>
    %c1_i32_28 = arith.constant 1 : i32
    %84 = tpu.dynamic_rotate %42 by %c1_i32_28 dim 1 : vector<2x128xf32>, i32 -> vector<2x128xf32>
    %cst_29 = arith.constant 0.000000e+00 : f32
    %85 = vector.broadcast %cst_29 : f32 to vector<2x128xf32>
    %86 = vector.shape_cast %25 : vector<1x128xi1> to vector<1x128xi1>
    %87 = vector.broadcast %86 : vector<1x128xi1> to vector<2x128xi1>
    %88 = arith.select %87, %84, %85 : vector<2x128xi1>, vector<2x128xf32>
    %c127_i32_30 = arith.constant 127 : i32
    %89 = tpu.dynamic_rotate %42 by %c127_i32_30 dim 1 : vector<2x128xf32>, i32 -> vector<2x128xf32>
    %cst_31 = arith.constant 0.000000e+00 : f32
    %90 = vector.broadcast %cst_31 : f32 to vector<2x128xf32>
    %91 = vector.shape_cast %27 : vector<1x128xi1> to vector<1x128xi1>
    %92 = vector.broadcast %91 : vector<1x128xi1> to vector<2x128xi1>
    %93 = arith.select %92, %89, %90 : vector<2x128xi1>, vector<2x128xf32>
    %c1_i32_32 = arith.constant 1 : i32
    %94 = tpu.dynamic_rotate %73 by %c1_i32_32 dim 1 : vector<2x128xf32>, i32 -> vector<2x128xf32>
    %cst_33 = arith.constant 0.000000e+00 : f32
    %95 = vector.broadcast %cst_33 : f32 to vector<2x128xf32>
    %96 = vector.shape_cast %25 : vector<1x128xi1> to vector<1x128xi1>
    %97 = vector.broadcast %96 : vector<1x128xi1> to vector<2x128xi1>
    %98 = arith.select %97, %94, %95 : vector<2x128xi1>, vector<2x128xf32>
    %c127_i32_34 = arith.constant 127 : i32
    %99 = tpu.dynamic_rotate %73 by %c127_i32_34 dim 1 : vector<2x128xf32>, i32 -> vector<2x128xf32>
    %cst_35 = arith.constant 0.000000e+00 : f32
    %100 = vector.broadcast %cst_35 : f32 to vector<2x128xf32>
    %101 = vector.shape_cast %27 : vector<1x128xi1> to vector<1x128xi1>
    %102 = vector.broadcast %101 : vector<1x128xi1> to vector<2x128xi1>
    %103 = arith.select %102, %99, %100 : vector<2x128xi1>, vector<2x128xf32>
    %104 = tpu.concatenate %78, %72, %83, %88, %42, %93, %98, %73, %103 in 0 : vector<2x128xf32>, vector<2x128xf32>, vector<2x128xf32>, vector<2x128xf32>, vector<2x128xf32>, vector<2x128xf32>, vector<2x128xf32>, vector<2x128xf32>, vector<2x128xf32> -> vector<18x128xf32>
    %c0_36 = arith.constant 0 : index
    %c0_37 = arith.constant 0 : index
    %105 = vector.load %arg5[%c0_36, %c0_37] : memref<4x18xf32, #tpu.memory_space<vmem>>, vector<4x18xf32>
    %cst_38 = arith.constant dense<0.000000e+00> : vector<4x128xf32>
    %106 = tpu.matmul %105, %104, %cst_38 {dimension_numbers = #tpu.dot_dimension_numbers<[1], [0], [0], [1], [0, 0, 1, 1], [], []>} : vector<4x18xf32>, vector<18x128xf32>, vector<4x128xf32> -> vector<4x128xf32>
    %cst_39 = arith.constant 0.000000e+00 : f32
    %107 = vector.shape_cast %7 : vector<1x128xi1> to vector<1x128xi1>
    %108 = vector.broadcast %107 : vector<1x128xi1> to vector<4x128xi1>
    %109 = vector.broadcast %cst_39 : f32 to vector<4x128xf32>
    %110 = arith.select %108, %106, %109 : vector<4x128xi1>, vector<4x128xf32>
    %c0_40 = arith.constant 0 : index
    %c0_41 = arith.constant 0 : index
    %c0_42 = arith.constant 0 : index
    %111 = vector.load %arg8[%c0_40, %c0_41, %c0_42] : memref<1x4x128xf32, #tpu.memory_space<vmem>>, vector<1x4x128xf32>
    %112 = vector.shape_cast %111 : vector<1x4x128xf32> to vector<4x128xf32>
    %113 = vector.shape_cast %110 : vector<4x128xf32> to vector<1x4x128xf32>
    tpu.vector_store %arg8[%c0_40, %c0_41, %c0_42], %113 {strides = array<i32>} : memref<1x4x128xf32, #tpu.memory_space<vmem>>, vector<1x4x128xf32>,
    %cst_43 = arith.constant dense<0.000000e+00> : vector<4xf32>
    %114 = vector.multi_reduction <add>, %110, %cst_43 [1] : vector<4x128xf32> to vector<4xf32>
    %115 = vector.shape_cast %114 : vector<4xf32> to vector<4x1xf32>
    %c0_44 = arith.constant 0 : index
    %c0_45 = arith.constant 0 : index
    %c0_46 = arith.constant 0 : index
    %c0_47 = arith.constant 0 : index
    %116 = vector.load %arg9[%c0_44, %c0_45, %c0_46, %c0_47] : memref<1x1x4x2xf32, #tpu.memory_space<vmem>>, vector<1x1x4x1xf32>
    %117 = vector.shape_cast %116 : vector<1x1x4x1xf32> to vector<4x1xf32>
    %118 = vector.shape_cast %115 : vector<4x1xf32> to vector<1x1x4x1xf32>
    tpu.vector_store %arg9[%c0_44, %c0_45, %c0_46, %c0_47], %118 {strides = array<i32>} : memref<1x1x4x2xf32, #tpu.memory_space<vmem>>, vector<1x1x4x1xf32>,
    %119 = arith.mulf %110, %110 : vector<4x128xf32>
    %cst_48 = arith.constant dense<0.000000e+00> : vector<4xf32>
    %120 = vector.multi_reduction <add>, %119, %cst_48 [1] : vector<4x128xf32> to vector<4xf32>
    %121 = vector.shape_cast %120 : vector<4xf32> to vector<4x1xf32>
    %c0_49 = arith.constant 0 : index
    %c0_50 = arith.constant 0 : index
    %c0_51 = arith.constant 0 : index
    %c1 = arith.constant 1 : index
    %122 = vector.load %arg9[%c0_49, %c0_50, %c0_51, %c1] : memref<1x1x4x2xf32, #tpu.memory_space<vmem>>, vector<1x1x4x1xf32>
    %123 = vector.shape_cast %122 : vector<1x1x4x1xf32> to vector<4x1xf32>
    %124 = vector.shape_cast %121 : vector<4x1xf32> to vector<1x1x4x1xf32>
    tpu.vector_store %arg9[%c0_49, %c0_50, %c0_51, %c1], %124 {strides = array<i32>} : memref<1x1x4x2xf32, #tpu.memory_space<vmem>>, vector<1x1x4x1xf32>,
    return
  }
  func.func @transform_0(%arg0: i32, %arg1: i32) -> (i32, i32, i32) {
    %c0_i32 = arith.constant 0 : i32
    %c0_i32_0 = arith.constant 0 : i32
    return %arg0, %c0_i32, %arg1 : i32, i32, i32
  }
  func.func @transform_1(%arg0: i32, %arg1: i32) -> (i32, i32, i32) {
    %c1_i32 = arith.constant 1 : i32
    %0 = arith.subi %arg1, %c1_i32 : i32
    %c0_i32 = arith.constant 0 : i32
    %1 = arith.maxsi %0, %c0_i32 : i32
    %c0_i32_0 = arith.constant 0 : i32
    %c0_i32_1 = arith.constant 0 : i32
    return %arg0, %c0_i32_0, %1 : i32, i32, i32
  }
  func.func @transform_2(%arg0: i32, %arg1: i32) -> (i32, i32, i32) {
    %c1_i32 = arith.constant 1 : i32
    %0 = arith.addi %arg1, %c1_i32 : i32
    %c1_i32_0 = arith.constant 1 : i32
    %1 = arith.minsi %0, %c1_i32_0 : i32
    %c0_i32 = arith.constant 0 : i32
    %c0_i32_1 = arith.constant 0 : i32
    return %arg0, %c0_i32, %1 : i32, i32, i32
  }
  func.func @transform_3(%arg0: i32, %arg1: i32) -> (i32, i32) {
    %c0_i32 = arith.constant 0 : i32
    %c0_i32_0 = arith.constant 0 : i32
    %c0_i32_1 = arith.constant 0 : i32
    return %c0_i32, %c0_i32_0 : i32, i32
  }
  func.func @transform_4(%arg0: i32, %arg1: i32) -> (i32, i32) {
    %c0_i32 = arith.constant 0 : i32
    %c0_i32_0 = arith.constant 0 : i32
    %c0_i32_1 = arith.constant 0 : i32
    return %c0_i32, %c0_i32_0 : i32, i32
  }
  func.func @transform_5(%arg0: i32, %arg1: i32) -> (i32, i32) {
    %c0_i32 = arith.constant 0 : i32
    %c0_i32_0 = arith.constant 0 : i32
    %c0_i32_1 = arith.constant 0 : i32
    return %c0_i32, %c0_i32_0 : i32, i32
  }
  func.func @transform_6(%arg0: i32, %arg1: i32) -> (i32, i32, i32) {
    %c0_i32 = arith.constant 0 : i32
    %c0_i32_0 = arith.constant 0 : i32
    return %arg0, %c0_i32, %arg1 : i32, i32, i32
  }
  func.func @transform_7(%arg0: i32, %arg1: i32) -> (i32, i32, i32, i32) {
    %c0_i32 = arith.constant 0 : i32
    %c0_i32_0 = arith.constant 0 : i32
    %c0_i32_1 = arith.constant 0 : i32
    return %arg0, %arg1, %c0_i32, %c0_i32_0 : i32, i32, i32, i32
  }
}

module attributes {stable_mosaic.version = 11 : i64} {
  func.func @_bn2_residual_kernel(%arg0: i32, %arg1: i32, %arg2: memref<1x4x256xf32, #tpu.memory_space<vmem>>, %arg3: memref<1x4x256xf32, #tpu.memory_space<vmem>>, %arg4: memref<4x1xf32, #tpu.memory_space<vmem>>, %arg5: memref<4x1xf32, #tpu.memory_space<vmem>>, %arg6: memref<1x4x256xf32, #tpu.memory_space<vmem>>) attributes {dimension_semantics = [#tpu.dimension_semantics<parallel>, #tpu.dimension_semantics<parallel>], iteration_bounds = array<i64: 2, 1>, scalar_prefetch = 0 : i64, scratch_operands = 0 : i64, tpu.core_type = #tpu.core_type<tc>, window_params = [{transform_indices = @transform_0, window_bounds = array<i64: 1, 4, 256>}, {transform_indices = @transform_1, window_bounds = array<i64: 1, 4, 256>}, {pipeline_mode = #tpu.pipeline_mode<synchronous>, transform_indices = @transform_2, window_bounds = array<i64: 4, 1>}, {pipeline_mode = #tpu.pipeline_mode<synchronous>, transform_indices = @transform_3, window_bounds = array<i64: 4, 1>}, {transform_indices = @transform_4, window_bounds = array<i64: 1, 4, 256>}]} {
    %c0 = arith.constant 0 : index
    %c0_0 = arith.constant 0 : index
    %c0_1 = arith.constant 0 : index
    %0 = vector.load %arg2[%c0, %c0_0, %c0_1] : memref<1x4x256xf32, #tpu.memory_space<vmem>>, vector<1x4x256xf32>
    %1 = vector.shape_cast %0 : vector<1x4x256xf32> to vector<4x256xf32>
    %c0_2 = arith.constant 0 : index
    %c0_3 = arith.constant 0 : index
    %2 = vector.load %arg4[%c0_2, %c0_3] : memref<4x1xf32, #tpu.memory_space<vmem>>, vector<4x1xf32>
    %3 = vector.broadcast %2 : vector<4x1xf32> to vector<4x256xf32>
    %4 = arith.mulf %1, %3 : vector<4x256xf32>
    %c0_4 = arith.constant 0 : index
    %c0_5 = arith.constant 0 : index
    %5 = vector.load %arg5[%c0_4, %c0_5] : memref<4x1xf32, #tpu.memory_space<vmem>>, vector<4x1xf32>
    %6 = vector.broadcast %5 : vector<4x1xf32> to vector<4x256xf32>
    %7 = arith.addf %4, %6 : vector<4x256xf32>
    %c0_6 = arith.constant 0 : index
    %c0_7 = arith.constant 0 : index
    %c0_8 = arith.constant 0 : index
    %8 = vector.load %arg3[%c0_6, %c0_7, %c0_8] : memref<1x4x256xf32, #tpu.memory_space<vmem>>, vector<1x4x256xf32>
    %9 = vector.shape_cast %8 : vector<1x4x256xf32> to vector<4x256xf32>
    %10 = arith.addf %7, %9 : vector<4x256xf32>
    %cst = arith.constant 0.000000e+00 : f32
    %11 = vector.broadcast %cst : f32 to vector<4x256xf32>
    %12 = arith.cmpf ogt, %10, %11 : vector<4x256xf32>
    %cst_9 = arith.constant 1.000000e-01 : f32
    %13 = vector.broadcast %cst_9 : f32 to vector<4x256xf32>
    %14 = arith.mulf %13, %10 : vector<4x256xf32>
    %15 = arith.select %12, %10, %14 : vector<4x256xi1>, vector<4x256xf32>
    %c0_10 = arith.constant 0 : index
    %c0_11 = arith.constant 0 : index
    %c0_12 = arith.constant 0 : index
    %16 = vector.load %arg6[%c0_10, %c0_11, %c0_12] : memref<1x4x256xf32, #tpu.memory_space<vmem>>, vector<1x4x256xf32>
    %17 = vector.shape_cast %16 : vector<1x4x256xf32> to vector<4x256xf32>
    %18 = vector.shape_cast %15 : vector<4x256xf32> to vector<1x4x256xf32>
    tpu.vector_store %arg6[%c0_10, %c0_11, %c0_12], %18 {strides = array<i32>} : memref<1x4x256xf32, #tpu.memory_space<vmem>>, vector<1x4x256xf32>,
    return
  }
  func.func @transform_0(%arg0: i32, %arg1: i32) -> (i32, i32, i32) {
    %c0_i32 = arith.constant 0 : i32
    %c0_i32_0 = arith.constant 0 : i32
    return %arg0, %c0_i32, %arg1 : i32, i32, i32
  }
  func.func @transform_1(%arg0: i32, %arg1: i32) -> (i32, i32, i32) {
    %c0_i32 = arith.constant 0 : i32
    %c0_i32_0 = arith.constant 0 : i32
    return %arg0, %c0_i32, %arg1 : i32, i32, i32
  }
  func.func @transform_2(%arg0: i32, %arg1: i32) -> (i32, i32) {
    %c0_i32 = arith.constant 0 : i32
    %c0_i32_0 = arith.constant 0 : i32
    %c0_i32_1 = arith.constant 0 : i32
    return %c0_i32, %c0_i32_0 : i32, i32
  }
  func.func @transform_3(%arg0: i32, %arg1: i32) -> (i32, i32) {
    %c0_i32 = arith.constant 0 : i32
    %c0_i32_0 = arith.constant 0 : i32
    %c0_i32_1 = arith.constant 0 : i32
    return %c0_i32, %c0_i32_0 : i32, i32
  }
  func.func @transform_4(%arg0: i32, %arg1: i32) -> (i32, i32, i32) {
    %c0_i32 = arith.constant 0 : i32
    %c0_i32_0 = arith.constant 0 : i32
    return %arg0, %c0_i32, %arg1 : i32, i32, i32
  }
}

</mosaic_0001>

<llo_original>
// kernel: residual_block.3
$region0: #{residual_block.3}
  #allocation0 [shape = 'u32[]', space=smem, size = 0x4, offset = 0x4, fixed_abs, tag = 'smem constant byte address 0x4 - core index']
  #allocation1 [shape = 'u32[72,128]{1,0:T(1,128)}', space=vmem, size = 0x9000, scoped, tag = 'internal scratch']
  %s0 = inlined_call_operand.vmem [shape: f32[2,4,256], index: 0, kind: input, shape index: {}]
  %s1 = inlined_call_operand.vmem [shape: f32[2,4], index: 1, kind: input, shape index: {}]
  %s2 = inlined_call_operand.vmem [shape: f32[2,2,256], index: 2, kind: output, shape index: {0}]
  %s3 = inlined_call_operand.vmem [shape: f32[2,1,2,2], index: 3, kind: output, shape index: {1}]
  %4 = xla_tuple %s2, %s3
  %s5 = sld [smem:[#allocation0]]
  $region49: #{residual_block.3} parent=0
    _
  %s7 = ssub.s32 1, %s5
  %s8 = scalar_select 0, %s7, %s5
  loop: start=0, step=1, limit=4
  $region2: #{residual_block.3} parent=0 // loop_pre_header
    _
  $region3: #{residual_block.3} parent=0 // loop_header
    %s10 = sphi 0, %s14
    %p11 = scmp.ge.s32.totalorder %s10, 4
    %s17 = sphi 0, %s29
    %s18 = sphi 0, %s25
    %s19 = sphi 0, %s17
    %s20 = sphi 0, %s18
    %s21 = sphi 0, %s19
    %s22 = sphi 0, %s20
    %s34 = sphi 0, %s36
    %s37 = sphi 0, %s34
    %s38 = sphi 0, %s37
    %s54 = sphi 0, %s38
    %s58 = sphi 0, %s58
    %s60 = sphi 0, %s58
    %s61 = sphi 0, %s60
    %s75 = sphi 0, %s61
    %s83 = sphi 0, %s85
    %s86 = sphi 0, %s83
    %s87 = sphi 0, %s86
    %s103 = sphi 0, %s87
    %s111 = sphi 0, %s113
    %s114 = sphi 0, %s111
    %s115 = sphi 0, %s114
    %s131 = sphi 0, %s115
  $region4: #{residual_block.3} parent=0 // loop_header_branch
    %13 = sbr.rel (%p11) target = $region8
  $region5: #{residual_block.3} parent=0 // loop_body
    %s15 = ssub.s32 %s10, 1
    %s16 = ssub.s32 %s10, 2
    %s23 = sadd.s32 1, %s18
    %p24 = scmp.ge.s32.totalorder %s23, 1
    %s25 = scalar_select %p24, 0, %s23
    %s26 = sadd.s32 1, %s17
    %s27 = scalar_select %p24, %s26, %s17
    %p28 = scmp.ge.s32.totalorder %s27, 2
    %s29 = scalar_select %p28, 0, %s27
    %s30 = ssub.s32 %s17, %s29
    %s31 = ssub.s32 %s18, %s25
    %s32 = sor.u32 %s30, %s31
    %p33 = scmp.eq.s32.totalorder %s32, 0
    %s35 = sadd.s32 %s34, 1
    %s36 = scalar_select %p33, %s34, %s35
    %p39 = pneg %p33
    %p40 = scmp.eq.s32.totalorder %s10, 1
    %p41 = por %p39, %p40
    %p42 = scmp.ne.s32.totalorder %s34, %s37
    %p43 = scmp.eq.s32.totalorder %s10, 0
    %p44 = por %p42, %p43
    %p45 = scmp.ne.s32.totalorder %s34, %s37
    %p46 = scmp.eq.s32.totalorder %s15, 1
    %p47 = por %p45, %p46
    %p48 = scmp.ne.s32.totalorder %s37, %s38
    %p49 = scmp.eq.s32.totalorder %s15, 0
    %p50 = por %p48, %p49
    %p51 = scmp.ne.s32.totalorder %s37, %s38
    %p52 = scmp.eq.s32.totalorder %s16, 1
    %p53 = por %p51, %p52
    %p55 = scmp.ne.s32.totalorder %s38, %s54
    %p56 = scmp.eq.s32.totalorder %s16, 0
    %p57 = por %p55, %p56
    %s59 = sadd.s32 %s58, 1
    %p62 = scmp.eq.s32.totalorder %s10, 1
    %p63 = scmp.ne.s32.totalorder %s58, %s60
    %p64 = scmp.eq.s32.totalorder %s10, 0
    %p65 = por %p63, %p64
    %p66 = scmp.ne.s32.totalorder %s58, %s60
    %p67 = scmp.eq.s32.totalorder %s15, 1
    %p68 = por %p66, %p67
    %p69 = scmp.ne.s32.totalorder %s60, %s61
    %p70 = scmp.eq.s32.totalorder %s15, 0
    %p71 = por %p69, %p70
    %p72 = scmp.ne.s32.totalorder %s60, %s61
    %p73 = scmp.eq.s32.totalorder %s16, 1
    %p74 = por %p72, %p73
    %p76 = scmp.ne.s32.totalorder %s61, %s75
    %p77 = scmp.eq.s32.totalorder %s16, 0
    %p78 = por %p76, %p77
    %s79 = ssub.s32 %s17, %s29
    %s80 = ssub.s32 %s18, %s25
    %s81 = sor.u32 %s79, %s80
    %p82 = scmp.eq.s32.totalorder %s81, 0
    %s84 = sadd.s32 %s83, 1
    %s85 = scalar_select %p82, %s83, %s84
    %p88 = pneg %p82
    %p89 = scmp.eq.s32.totalorder %s10, 1
    %p90 = por %p88, %p89
    %p91 = scmp.ne.s32.totalorder %s83, %s86
    %p92 = scmp.eq.s32.totalorder %s10, 0
    %p93 = por %p91, %p92
    %p94 = scmp.ne.s32.totalorder %s83, %s86
    %p95 = scmp.eq.s32.totalorder %s15, 1
    %p96 = por %p94, %p95
    %p97 = scmp.ne.s32.totalorder %s86, %s87
    %p98 = scmp.eq.s32.totalorder %s15, 0
    %p99 = por %p97, %p98
    %p100 = scmp.ne.s32.totalorder %s86, %s87
    %p101 = scmp.eq.s32.totalorder %s16, 1
    %p102 = por %p100, %p101
    %p104 = scmp.ne.s32.totalorder %s87, %s103
    %p105 = scmp.eq.s32.totalorder %s16, 0
    %p106 = por %p104, %p105
    %s107 = ssub.s32 %s17, %s29
    %s108 = ssub.s32 %s18, %s25
    %s109 = sor.u32 %s107, %s108
    %p110 = scmp.eq.s32.totalorder %s109, 0
    %s112 = sadd.s32 %s111, 1
    %s113 = scalar_select %p110, %s111, %s112
    %p116 = pneg %p110
    %p117 = scmp.eq.s32.totalorder %s10, 1
    %p118 = por %p116, %p117
    %p119 = scmp.ne.s32.totalorder %s111, %s114
    %p120 = scmp.eq.s32.totalorder %s10, 0
    %p121 = por %p119, %p120
    %p122 = scmp.ne.s32.totalorder %s111, %s114
    %p123 = scmp.eq.s32.totalorder %s15, 1
    %p124 = por %p122, %p123
    %p125 = scmp.ne.s32.totalorder %s114, %s115
    %p126 = scmp.eq.s32.totalorder %s15, 0
    %p127 = por %p125, %p126
    %p128 = scmp.ne.s32.totalorder %s114, %s115
    %p129 = scmp.eq.s32.totalorder %s16, 1
    %p130 = por %p128, %p129
    %p132 = scmp.ne.s32.totalorder %s115, %s131
    %p133 = scmp.eq.s32.totalorder %s16, 0
    %p134 = por %p132, %p133
    %p135 = scmp.le.s32.totalorder 1, %s10
    %p136 = scmp.lt.s32.totalorder %s10, 3
    %p137 = pnand %p135, %p136
    %p138 = pneg %p137
    // Predicated region
    $region9: #{residual_block.3} parent=5 // pred_check
      _
    $region10: #{residual_block.3} parent=5 // pred_check_branch
      %140 = sbr.rel (%p137) target = $region12
    $region11: #{residual_block.3} parent=5 // pred_region
      %s141 = ssub.s32 %s10, 1
      // Predicated region
      $region13: #{residual_block.3} parent=11 // pred_check
        %p142 = pneg %p71
      $region14: #{residual_block.3} parent=11 // pred_check_branch
        %144 = sbr.rel (%p142) target = $region16
      $region15: #{residual_block.3} parent=11 // pred_region
        _
      $region16: #{residual_block.3} parent=11 // pred_fallthru
        _
    $region12: #{residual_block.3} parent=5 // pred_fallthru
      _
    %p145 = scmp.lt.s32.totalorder %s10, 2
    // Predicated region
    $region17: #{residual_block.3} parent=5 // pred_check
      %p146 = pneg %p145
    $region18: #{residual_block.3} parent=5 // pred_check_branch
      %148 = sbr.rel (%p146) target = $region20
    $region19: #{residual_block.3} parent=5 // pred_region
      // Predicated region
      $region21: #{residual_block.3} parent=19 // pred_check
        %p149 = pneg %p44
      $region22: #{residual_block.3} parent=19 // pred_check_branch
        %151 = sbr.rel (%p149) target = $region24
      $region23: #{residual_block.3} parent=19 // pred_region
        %s152 = smul.u32 2, %s18
        %p153 = scmp.lt.s32.totalorder %s17, 1
        %s154 = scalar_select %p153, %s17, 1
        %p155 = scmp.lt.s32.totalorder %s152, 1
        %s156 = scalar_select %p155, %s152, 1
        %s157 = smul.addr %s154, 2
        %s158 = sadd.s32 %s156, %s157
        %s159 = smul.addr %s158, 4
        %s160 = scalar_lea.vmem %s0, %s159
        %s161 = smul.u32 2, %s18
      $region24: #{residual_block.3} parent=19 // pred_fallthru
        _
    $region20: #{residual_block.3} parent=5 // pred_fallthru
      _
    %p162 = scmp.le.s32.totalorder 1, %s10
    %p163 = scmp.lt.s32.totalorder %s10, 3
    %p164 = pnand %p162, %p163
    %p165 = pneg %p164
    // Predicated region
    $region25: #{residual_block.3} parent=5 // pred_check
      _
    $region26: #{residual_block.3} parent=5 // pred_check_branch
      %167 = sbr.rel (%p164) target = $region28
    $region27: #{residual_block.3} parent=5 // pred_region
      %s168 = ssub.s32 %s10, 1
      %s169 = smul.u32 2, %s20
      %p170 = scmp.lt.s32.totalorder %s19, 1
      %s171 = scalar_select %p170, %s19, 1
      %p172 = scmp.lt.s32.totalorder %s169, 1
      %s173 = scalar_select %p172, %s169, 1
      %s174 = smul.addr %s171, 2
      %s175 = sadd.s32 %s173, %s174
      %s176 = smul.addr %s175, 4
      %s177 = scalar_lea.vmem %s0, %s176
      %p178 = pneg %p50
      %p179 = pneg %p47
      %p180 = pneg %p71
      %p181 = pneg %p68
      %p182 = pneg %p99
      %p183 = pneg %p96
      %s184 = smul.u32 2, %s20
      %p185 = scmp.lt.s32.totalorder %s19, 1
      %s186 = scalar_select %p185, %s19, 1
      %p187 = scmp.lt.s32.totalorder %s184, 1
      %s188 = scalar_select %p187, %s184, 1
      %s189 = smul.addr %s186, 2
      %s190 = sadd.s32 %s188, %s189
      %s191 = smul.addr %s190, 2
      %s192 = scalar_lea.vmem %s2, %s191
      %p193 = pneg %p127
      %p194 = pneg %p124
      %p195 = scmp.lt.s32.totalorder %s19, 1
      %s196 = scalar_select %p195, %s19, 1
      %p197 = scmp.lt.s32.totalorder %s20, 0
      %s198 = scalar_select %p197, %s20, 0
      %s199 = sadd.s32 %s198, %s196
      %s200 = smul.addr %s199, 2
      %s201 = scalar_lea.vmem %s3, %s200
      %s202 = smul.u32 2, %s20
      %p203 = scmp.lt.s32.totalorder %s19, 1
      %s204 = scalar_select %p203, %s19, 1
      %p205 = scmp.lt.s32.totalorder %s202, 1
      %s206 = scalar_select %p205, %s202, 1
      %s207 = smul.addr %s204, 2
      %s208 = sadd.s32 %s206, %s207
      %s209 = smul.addr %s208, 4
      %s210 = scalar_lea.vmem %s0, %s209
      %s211 = smul.u32 2, %s20
      %s212 = smul.u32 2, %s20
      %p213 = scmp.lt.s32.totalorder %s19, 1
      %s214 = scalar_select %p213, %s19, 1
      %p215 = scmp.lt.s32.totalorder %s212, 1
      %s216 = scalar_select %p215, %s212, 1
      %s217 = smul.addr %s214, 2
      %s218 = sadd.s32 %s216, %s217
      %s219 = smul.addr %s218, 2
      %s220 = scalar_lea.vmem %s2, %s219
      %s221 = smul.u32 2, %s20
      %p222 = scmp.lt.s32.totalorder %s19, 1
      %s223 = scalar_select %p222, %s19, 1
      %p224 = scmp.lt.s32.totalorder %s20, 0
      %s225 = scalar_select %p224, %s20, 0
      %s226 = sadd.s32 %s225, %s223
      %s227 = smul.addr %s226, 2
      %s228 = scalar_lea.vmem %s3, %s227
      %v229 = vld [vmem:[%s210] sm:$0xff]
      %v230 = vld [vmem:[%s1] sm:$0x3]
      %232 = vst [vmem:[#allocation1] ss:$2 sm:$0xff] %v229
      %v233 = vld.sshfl [vmem:[#allocation1] sm:$0xff pattern:$0x75316420]
      %v234 = vld.sshfl [vmem:[#allocation1 + $0x8] sm:$0xff pattern:$0x75316420]
      %vm235 = vcmask 31744
      %v237 = vsel %vm235, %v230, 0
      %vm239 = vcmask 1043456
      %v240 = vsel %vm239, %v233, 0
      %v242 = vsel %vm239, %v234, 0
      %244 = vmatpush.msra.mxu0 0.0
      %245 = vmatpush.msra.mxu0 0.0
      %246 = vmatpush.msra.mxu0 0.0
      %247 = vmatpush.msra.mxu0 0.0
      %248 = vmatpush.msra.mxu0 0.0
      %249 = vmatpush.msra.mxu0 0.0
      %250 = vmatpush.msra.mxu0 0.0
      %251 = vmatpush.msra.mxu0 0.0
      %252 = vmatpush.msra.mxu0 0.0
      %253 = vmatpush.msra.mxu0 0.0
      %254 = vmatpush.msra.mxu0 0.0
      %255 = vmatpush.msra.mxu0 0.0
      %256 = vmatpush.msra.mxu0 0.0
      %257 = vmatpush.msra.mxu0 0.0
      %258 = vmatpush.msra.mxu0 0.0
      %259 = vmatpush.msra.mxu0 %v240
      %260 = vmatmul.f32.gmra.mxu0 %v237
      %v261 = vpop.f32.mrf.mxu0
      %v262 = vadd.f32 0.0, %v261
      %263 = vdwg.mxu0
      %264 = vmatpush.msra.mxu0 0.0
      %265 = vmatpush.msra.mxu0 0.0
      %266 = vmatpush.msra.mxu0 0.0
      %267 = vmatpush.msra.mxu0 0.0
      %268 = vmatpush.msra.mxu0 0.0
      %269 = vmatpush.msra.mxu0 0.0
      %270 = vmatpush.msra.mxu0 0.0
      %271 = vmatpush.msra.mxu0 0.0
      %272 = vmatpush.msra.mxu0 0.0
      %273 = vmatpush.msra.mxu0 0.0
      %274 = vmatpush.msra.mxu0 0.0
      %275 = vmatpush.msra.mxu0 0.0
      %276 = vmatpush.msra.mxu0 0.0
      %277 = vmatpush.msra.mxu0 0.0
      %278 = vmatpush.msra.mxu0 0.0
      %279 = vmatpush.msra.mxu0 %v242
      %280 = vmatmul.f32.gmra.mxu0 %v237
      %v281 = vpop.f32.mrf.mxu0
      %v282 = vadd.f32 0.0, %v281
      %283 = vdwg.mxu0
      %v286 = vrot.slane %v282, 6
      %vm287 = vcmask 1041408
      %v288 = vsel %vm287, %v262, %v286
      %290 = vst [vmem:[%s220] sm:$0xf] %v288
      %v291 = vsel %vm287, %v262, 0.0
      %v292 = vsel %vm287, %v282, 0.0
      %v293 = vadd.f32 %v291, %v292
      %294 = vadd.xlane.f32.xlu0 %v293
      %v295 = vpop.xlane.xlu0 %294
      %vm296 = vcmask 1024
      %297 = vst.msk [vmem:[%s228] sm:$0x3] %vm296, %v295
      %v298 = vmul.f32 %v262, %v262
      %v299 = vmul.f32 %v282, %v282
      %v300 = vsel %vm287, %v298, 0.0
      %v301 = vsel %vm287, %v299, 0.0
      %v302 = vadd.f32 %v300, %v301
      %303 = vadd.xlane.f32.xlu0 %v302
      %v304 = vpop.xlane.xlu0 %303
      %vm305 = vcmask 9224
      %306 = vst.msk [vmem:[%s228] sm:$0x3] %vm305, %v304
      %s307 = smul.u32 2, %s20
      %p308 = scmp.lt.s32.totalorder %s19, 1
      %s309 = scalar_select %p308, %s19, 1
      %p310 = scmp.lt.s32.totalorder %s307, 1
      %s311 = scalar_select %p310, %s307, 1
      %s312 = smul.addr %s309, 2
      %s313 = sadd.s32 %s311, %s312
      %s314 = smul.addr %s313, 2
      %s315 = scalar_lea.vmem %s2, %s314
      %p316 = scmp.lt.s32.totalorder %s19, 1
      %s317 = scalar_select %p316, %s19, 1
      %p318 = scmp.lt.s32.totalorder %s20, 0
      %s319 = scalar_select %p318, %s20, 0
      %s320 = sadd.s32 %s319, %s317
      %s321 = smul.addr %s320, 2
      %s322 = scalar_lea.vmem %s3, %s321
      // Predicated region
      $region29: #{residual_block.3} parent=27 // pred_check
        %p323 = pneg %p96
      $region30: #{residual_block.3} parent=27 // pred_check_branch
        %325 = sbr.rel (%p323) target = $region32
      $region31: #{residual_block.3} parent=27 // pred_region
        %s326 = smul.u32 2, %s20
      $region32: #{residual_block.3} parent=27 // pred_fallthru
        _
      // Predicated region
      $region33: #{residual_block.3} parent=27 // pred_check
        %p327 = pneg %p124
      $region34: #{residual_block.3} parent=27 // pred_check_branch
        %329 = sbr.rel (%p327) target = $region36
      $region35: #{residual_block.3} parent=27 // pred_region
        _
      $region36: #{residual_block.3} parent=27 // pred_fallthru
        _
    $region28: #{residual_block.3} parent=5 // pred_fallthru
      _
    %p330 = scmp.le.s32.totalorder 2, %s10
    // Predicated region
    $region37: #{residual_block.3} parent=5 // pred_check
      %p331 = pneg %p330
    $region38: #{residual_block.3} parent=5 // pred_check_branch
      %333 = sbr.rel (%p331) target = $region40
    $region39: #{residual_block.3} parent=5 // pred_region
      %s334 = ssub.s32 %s10, 2
      // Predicated region
      $region41: #{residual_block.3} parent=39 // pred_check
        %p335 = pneg %p102
      $region42: #{residual_block.3} parent=39 // pred_check_branch
        %337 = sbr.rel (%p335) target = $region44
      $region43: #{residual_block.3} parent=39 // pred_region
        %s338 = smul.u32 2, %s22
        %p339 = scmp.lt.s32.totalorder %s21, 1
        %s340 = scalar_select %p339, %s21, 1
        %p341 = scmp.lt.s32.totalorder %s338, 1
        %s342 = scalar_select %p341, %s338, 1
        %s343 = smul.addr %s340, 2
        %s344 = sadd.s32 %s342, %s343
        %s345 = smul.addr %s344, 2
        %s346 = scalar_lea.vmem %s2, %s345
      $region44: #{residual_block.3} parent=39 // pred_fallthru
        _
      // Predicated region
      $region45: #{residual_block.3} parent=39 // pred_check
        %p347 = pneg %p130
      $region46: #{residual_block.3} parent=39 // pred_check_branch
        %349 = sbr.rel (%p347) target = $region48
      $region47: #{residual_block.3} parent=39 // pred_region
        %p350 = scmp.lt.s32.totalorder %s21, 1
        %s351 = scalar_select %p350, %s21, 1
        %p352 = scmp.lt.s32.totalorder %s22, 0
        %s353 = scalar_select %p352, %s22, 0
        %s354 = sadd.s32 %s353, %s351
        %s355 = smul.addr %s354, 2
        %s356 = scalar_lea.vmem %s3, %s355
      $region48: #{residual_block.3} parent=39 // pred_fallthru
        _
    $region40: #{residual_block.3} parent=5 // pred_fallthru
      _
  $region6: #{residual_block.3} parent=0 // loop_footer
    %s14 = sadd.s32 1, %s10
  $region7: #{residual_block.3} parent=0 // loop_footer_branch
    %9 = sbr.rel target = $region3
  $region8: #{residual_block.3} parent=0 // loop_exit
    _

// kernel: residual_block.4
$region0: #{residual_block.4}
  #allocation0 [shape = 'u32[]', space=smem, size = 0x4, offset = 0x4, fixed_abs, tag = 'smem constant byte address 0x4 - core index']
  #allocation1 [shape = 'u32[72,128]{1,0:T(1,128)}', space=vmem, size = 0x9000, scoped, tag = 'internal scratch']
  %s0 = inlined_call_operand.vmem [shape: f32[2,2,256], index: 0, kind: input, shape index: {}, may-alias: {0,1,2}]
  %s1 = inlined_call_operand.vmem [shape: f32[2,2,256], index: 1, kind: input, shape index: {}, may-alias: {0,1,2}]
  %s2 = inlined_call_operand.vmem [shape: f32[2,2,256], index: 2, kind: input, shape index: {}, may-alias: {0,1,2}]
  %s3 = inlined_call_operand.vmem [shape: f32[4,18], index: 3, kind: input, shape index: {}]
  %s4 = inlined_call_operand.vmem [shape: f32[2,1], index: 4, kind: input, shape index: {}]
  %s5 = inlined_call_operand.vmem [shape: f32[2,1], index: 5, kind: input, shape index: {}]
  %s6 = inlined_call_operand.vmem [shape: f32[2,4,256], index: 6, kind: output, shape index: {0}]
  %s7 = inlined_call_operand.vmem [shape: f32[2,2,4,2], index: 7, kind: output, shape index: {1}]
  %8 = xla_tuple %s6, %s7
  %s9 = sld [smem:[#allocation0]]
  $region65: #{residual_block.4} parent=0
    _
  %s11 = ssub.s32 1, %s9
  %s12 = scalar_select 0, %s11, %s9
  loop: start=0, step=1, limit=6
  $region2: #{residual_block.4} parent=0 // loop_pre_header
    _
  $region3: #{residual_block.4} parent=0 // loop_header
    %s14 = sphi 0, %s18
    %p15 = scmp.ge.s32.totalorder %s14, 6
    %s21 = sphi 0, %s33
    %s22 = sphi 0, %s29
    %s23 = sphi 0, %s21
    %s24 = sphi 0, %s22
    %s25 = sphi 0, %s23
    %s26 = sphi 0, %s24
    %s38 = sphi 0, %s40
    %s41 = sphi 0, %s38
    %s42 = sphi 0, %s41
    %s58 = sphi 0, %s42
    %s72 = sphi 0, %s74
    %s75 = sphi 0, %s72
    %s76 = sphi 0, %s75
    %s92 = sphi 0, %s76
    %s106 = sphi 0, %s108
    %s109 = sphi 0, %s106
    %s110 = sphi 0, %s109
    %s126 = sphi 0, %s110
    %s130 = sphi 0, %s130
    %s132 = sphi 0, %s130
    %s133 = sphi 0, %s132
    %s147 = sphi 0, %s133
    %s151 = sphi 0, %s151
    %s153 = sphi 0, %s151
    %s154 = sphi 0, %s153
    %s168 = sphi 0, %s154
    %s172 = sphi 0, %s172
    %s174 = sphi 0, %s172
    %s175 = sphi 0, %s174
    %s189 = sphi 0, %s175
    %s197 = sphi 0, %s199
    %s200 = sphi 0, %s197
    %s201 = sphi 0, %s200
    %s217 = sphi 0, %s201
    %s225 = sphi 0, %s227
    %s228 = sphi 0, %s225
    %s229 = sphi 0, %s228
    %s245 = sphi 0, %s229
  $region4: #{residual_block.4} parent=0 // loop_header_branch
    %17 = sbr.rel (%p15) target = $region8
  $region5: #{residual_block.4} parent=0 // loop_body
    %s19 = ssub.s32 %s14, 1
    %s20 = ssub.s32 %s14, 2
    %s27 = sadd.s32 1, %s22
    %p28 = scmp.ge.s32.totalorder %s27, 2
    %s29 = scalar_select %p28, 0, %s27
    %s30 = sadd.s32 1, %s21
    %s31 = scalar_select %p28, %s30, %s21
    %p32 = scmp.ge.s32.totalorder %s31, 2
    %s33 = scalar_select %p32, 0, %s31
    %s34 = ssub.s32 %s21, %s33
    %s35 = ssub.s32 %s22, %s29
    %s36 = sor.u32 %s34, %s35
    %p37 = scmp.eq.s32.totalorder %s36, 0
    %s39 = sadd.s32 %s38, 1
    %s40 = scalar_select %p37, %s38, %s39
    %p43 = pneg %p37
    %p44 = scmp.eq.s32.totalorder %s14, 3
    %p45 = por %p43, %p44
    %p46 = scmp.ne.s32.totalorder %s38, %s41
    %p47 = scmp.eq.s32.totalorder %s14, 0
    %p48 = por %p46, %p47
    %p49 = scmp.ne.s32.totalorder %s38, %s41
    %p50 = scmp.eq.s32.totalorder %s19, 3
    %p51 = por %p49, %p50
    %p52 = scmp.ne.s32.totalorder %s41, %s42
    %p53 = scmp.eq.s32.totalorder %s19, 0
    %p54 = por %p52, %p53
    %p55 = scmp.ne.s32.totalorder %s41, %s42
    %p56 = scmp.eq.s32.totalorder %s20, 3
    %p57 = por %p55, %p56
    %p59 = scmp.ne.s32.totalorder %s42, %s58
    %p60 = scmp.eq.s32.totalorder %s20, 0
    %p61 = por %p59, %p60
    %s62 = ssub.s32 %s22, 1
    %p63 = scmp.gt.s32.totalorder %s62, 0
    %s64 = scalar_select %p63, %s62, 0
    %s65 = ssub.s32 %s29, 1
    %p66 = scmp.gt.s32.totalorder %s65, 0
    %s67 = scalar_select %p66, %s65, 0
    %s68 = ssub.s32 %s21, %s33
    %s69 = ssub.s32 %s64, %s67
    %s70 = sor.u32 %s68, %s69
    %p71 = scmp.eq.s32.totalorder %s70, 0
    %s73 = sadd.s32 %s72, 1
    %s74 = scalar_select %p71, %s72, %s73
    %p77 = pneg %p71
    %p78 = scmp.eq.s32.totalorder %s14, 3
    %p79 = por %p77, %p78
    %p80 = scmp.ne.s32.totalorder %s72, %s75
    %p81 = scmp.eq.s32.totalorder %s14, 0
    %p82 = por %p80, %p81
    %p83 = scmp.ne.s32.totalorder %s72, %s75
    %p84 = scmp.eq.s32.totalorder %s19, 3
    %p85 = por %p83, %p84
    %p86 = scmp.ne.s32.totalorder %s75, %s76
    %p87 = scmp.eq.s32.totalorder %s19, 0
    %p88 = por %p86, %p87
    %p89 = scmp.ne.s32.totalorder %s75, %s76
    %p90 = scmp.eq.s32.totalorder %s20, 3
    %p91 = por %p89, %p90
    %p93 = scmp.ne.s32.totalorder %s76, %s92
    %p94 = scmp.eq.s32.totalorder %s20, 0
    %p95 = por %p93, %p94
    %s96 = sadd.s32 %s22, 1
    %p97 = scmp.lt.s32.totalorder %s96, 1
    %s98 = scalar_select %p97, %s96, 1
    %s99 = sadd.s32 %s29, 1
    %p100 = scmp.lt.s32.totalorder %s99, 1
    %s101 = scalar_select %p100, %s99, 1
    %s102 = ssub.s32 %s21, %s33
    %s103 = ssub.s32 %s98, %s101
    %s104 = sor.u32 %s102, %s103
    %p105 = scmp.eq.s32.totalorder %s104, 0
    %s107 = sadd.s32 %s106, 1
    %s108 = scalar_select %p105, %s106, %s107
    %p111 = pneg %p105
    %p112 = scmp.eq.s32.totalorder %s14, 3
    %p113 = por %p111, %p112
    %p114 = scmp.ne.s32.totalorder %s106, %s109
    %p115 = scmp.eq.s32.totalorder %s14, 0
    %p116 = por %p114, %p115
    %p117 = scmp.ne.s32.totalorder %s106, %s109
    %p118 = scmp.eq.s32.totalorder %s19, 3
    %p119 = por %p117, %p118
    %p120 = scmp.ne.s32.totalorder %s109, %s110
    %p121 = scmp.eq.s32.totalorder %s19, 0
    %p122 = por %p120, %p121
    %p123 = scmp.ne.s32.totalorder %s109, %s110
    %p124 = scmp.eq.s32.totalorder %s20, 3
    %p125 = por %p123, %p124
    %p127 = scmp.ne.s32.totalorder %s110, %s126
    %p128 = scmp.eq.s32.totalorder %s20, 0
    %p129 = por %p127, %p128
    %s131 = sadd.s32 %s130, 1
    %p134 = scmp.eq.s32.totalorder %s14, 3
    %p135 = scmp.ne.s32.totalorder %s130, %s132
    %p136 = scmp.eq.s32.totalorder %s14, 0
    %p137 = por %p135, %p136
    %p138 = scmp.ne.s32.totalorder %s130, %s132
    %p139 = scmp.eq.s32.totalorder %s19, 3
    %p140 = por %p138, %p139
    %p141 = scmp.ne.s32.totalorder %s132, %s133
    %p142 = scmp.eq.s32.totalorder %s19, 0
    %p143 = por %p141, %p142
    %p144 = scmp.ne.s32.totalorder %s132, %s133
    %p145 = scmp.eq.s32.totalorder %s20, 3
    %p146 = por %p144, %p145
    %p148 = scmp.ne.s32.totalorder %s133, %s147
    %p149 = scmp.eq.s32.totalorder %s20, 0
    %p150 = por %p148, %p149
    %s152 = sadd.s32 %s151, 1
    %p155 = scmp.eq.s32.totalorder %s14, 3
    %p156 = scmp.ne.s32.totalorder %s151, %s153
    %p157 = scmp.eq.s32.totalorder %s14, 0
    %p158 = por %p156, %p157
    %p159 = scmp.ne.s32.totalorder %s151, %s153
    %p160 = scmp.eq.s32.totalorder %s19, 3
    %p161 = por %p159, %p160
    %p162 = scmp.ne.s32.totalorder %s153, %s154
    %p163 = scmp.eq.s32.totalorder %s19, 0
    %p164 = por %p162, %p163
    %p165 = scmp.ne.s32.totalorder %s153, %s154
    %p166 = scmp.eq.s32.totalorder %s20, 3
    %p167 = por %p165, %p166
    %p169 = scmp.ne.s32.totalorder %s154, %s168
    %p170 = scmp.eq.s32.totalorder %s20, 0
    %p171 = por %p169, %p170
    %s173 = sadd.s32 %s172, 1
    %p176 = scmp.eq.s32.totalorder %s14, 3
    %p177 = scmp.ne.s32.totalorder %s172, %s174
    %p178 = scmp.eq.s32.totalorder %s14, 0
    %p179 = por %p177, %p178
    %p180 = scmp.ne.s32.totalorder %s172, %s174
    %p181 = scmp.eq.s32.totalorder %s19, 3
    %p182 = por %p180, %p181
    %p183 = scmp.ne.s32.totalorder %s174, %s175
    %p184 = scmp.eq.s32.totalorder %s19, 0
    %p185 = por %p183, %p184
    %p186 = scmp.ne.s32.totalorder %s174, %s175
    %p187 = scmp.eq.s32.totalorder %s20, 3
    %p188 = por %p186, %p187
    %p190 = scmp.ne.s32.totalorder %s175, %s189
    %p191 = scmp.eq.s32.totalorder %s20, 0
    %p192 = por %p190, %p191
    %s193 = ssub.s32 %s21, %s33
    %s194 = ssub.s32 %s22, %s29
    %s195 = sor.u32 %s193, %s194
    %p196 = scmp.eq.s32.totalorder %s195, 0
    %s198 = sadd.s32 %s197, 1
    %s199 = scalar_select %p196, %s197, %s198
    %p202 = pneg %p196
    %p203 = scmp.eq.s32.totalorder %s14, 3
    %p204 = por %p202, %p203
    %p205 = scmp.ne.s32.totalorder %s197, %s200
    %p206 = scmp.eq.s32.totalorder %s14, 0
    %p207 = por %p205, %p206
    %p208 = scmp.ne.s32.totalorder %s197, %s200
    %p209 = scmp.eq.s32.totalorder %s19, 3
    %p210 = por %p208, %p209
    %p211 = scmp.ne.s32.totalorder %s200, %s201
    %p212 = scmp.eq.s32.totalorder %s19, 0
    %p213 = por %p211, %p212
    %p214 = scmp.ne.s32.totalorder %s200, %s201
    %p215 = scmp.eq.s32.totalorder %s20, 3
    %p216 = por %p214, %p215
    %p218 = scmp.ne.s32.totalorder %s201, %s217
    %p219 = scmp.eq.s32.totalorder %s20, 0
    %p220 = por %p218, %p219
    %s221 = ssub.s32 %s21, %s33
    %s222 = ssub.s32 %s22, %s29
    %s223 = sor.u32 %s221, %s222
    %p224 = scmp.eq.s32.totalorder %s223, 0
    %s226 = sadd.s32 %s225, 1
    %s227 = scalar_select %p224, %s225, %s226
    %p230 = pneg %p224
    %p231 = scmp.eq.s32.totalorder %s14, 3
    %p232 = por %p230, %p231
    %p233 = scmp.ne.s32.totalorder %s225, %s228
    %p234 = scmp.eq.s32.totalorder %s14, 0
    %p235 = por %p233, %p234
    %p236 = scmp.ne.s32.totalorder %s225, %s228
    %p237 = scmp.eq.s32.totalorder %s19, 3
    %p238 = por %p236, %p237
    %p239 = scmp.ne.s32.totalorder %s228, %s229
    %p240 = scmp.eq.s32.totalorder %s19, 0
    %p241 = por %p239, %p240
    %p242 = scmp.ne.s32.totalorder %s228, %s229
    %p243 = scmp.eq.s32.totalorder %s20, 3
    %p244 = por %p242, %p243
    %p246 = scmp.ne.s32.totalorder %s229, %s245
    %p247 = scmp.eq.s32.totalorder %s20, 0
    %p248 = por %p246, %p247
    %p249 = scmp.le.s32.totalorder 1, %s14
    %p250 = scmp.lt.s32.totalorder %s14, 5
    %p251 = pnand %p249, %p250
    %p252 = pneg %p251
    // Predicated region
    $region9: #{residual_block.4} parent=5 // pred_check
      _
    $region10: #{residual_block.4} parent=5 // pred_check_branch
      %254 = sbr.rel (%p251) target = $region12
    $region11: #{residual_block.4} parent=5 // pred_region
      %s255 = ssub.s32 %s14, 1
      // Predicated region
      $region13: #{residual_block.4} parent=11 // pred_check
        %p256 = pneg %p143
      $region14: #{residual_block.4} parent=11 // pred_check_branch
        %258 = sbr.rel (%p256) target = $region16
      $region15: #{residual_block.4} parent=11 // pred_region
        _
      $region16: #{residual_block.4} parent=11 // pred_fallthru
        _
      // Predicated region
      $region17: #{residual_block.4} parent=11 // pred_check
        %p259 = pneg %p164
      $region18: #{residual_block.4} parent=11 // pred_check_branch
        %261 = sbr.rel (%p259) target = $region20
      $region19: #{residual_block.4} parent=11 // pred_region
        _
      $region20: #{residual_block.4} parent=11 // pred_fallthru
        _
      // Predicated region
      $region21: #{residual_block.4} parent=11 // pred_check
        %p262 = pneg %p185
      $region22: #{residual_block.4} parent=11 // pred_check_branch
        %264 = sbr.rel (%p262) target = $region24
      $region23: #{residual_block.4} parent=11 // pred_region
        _
      $region24: #{residual_block.4} parent=11 // pred_fallthru
        _
    $region12: #{residual_block.4} parent=5 // pred_fallthru
      _
    %p265 = scmp.lt.s32.totalorder %s14, 4
    // Predicated region
    $region25: #{residual_block.4} parent=5 // pred_check
      %p266 = pneg %p265
    $region26: #{residual_block.4} parent=5 // pred_check_branch
      %268 = sbr.rel (%p266) target = $region28
    $region27: #{residual_block.4} parent=5 // pred_region
      // Predicated region
      $region29: #{residual_block.4} parent=27 // pred_check
        %p269 = pneg %p48
      $region30: #{residual_block.4} parent=27 // pred_check_branch
        %271 = sbr.rel (%p269) target = $region32
      $region31: #{residual_block.4} parent=27 // pred_region
        %p272 = scmp.lt.s32.totalorder %s21, 1
        %s273 = scalar_select %p272, %s21, 1
        %p274 = scmp.lt.s32.totalorder %s22, 1
        %s275 = scalar_select %p274, %s22, 1
        %s276 = smul.addr %s273, 2
        %s277 = sadd.s32 %s275, %s276
        %s278 = smul.addr %s277, 2
        %s279 = scalar_lea.vmem %s0, %s278
      $region32: #{residual_block.4} parent=27 // pred_fallthru
        _
      // Predicated region
      $region33: #{residual_block.4} parent=27 // pred_check
        %p280 = pneg %p82
      $region34: #{residual_block.4} parent=27 // pred_check_branch
        %282 = sbr.rel (%p280) target = $region36
      $region35: #{residual_block.4} parent=27 // pred_region
        %s283 = ssub.s32 %s22, 1
        %p284 = scmp.gt.s32.totalorder %s283, 0
        %s285 = scalar_select %p284, %s283, 0
        %p286 = scmp.lt.s32.totalorder %s21, 1
        %s287 = scalar_select %p286, %s21, 1
        %p288 = scmp.lt.s32.totalorder %s285, 1
        %s289 = scalar_select %p288, %s285, 1
        %s290 = smul.addr %s287, 2
        %s291 = sadd.s32 %s289, %s290
        %s292 = smul.addr %s291, 2
        %s293 = scalar_lea.vmem %s1, %s292
        %s294 = ssub.s32 %s22, 1
        %p295 = scmp.gt.s32.totalorder %s294, 0
        %s296 = scalar_select %p295, %s294, 0
      $region36: #{residual_block.4} parent=27 // pred_fallthru
        _
      // Predicated region
      $region37: #{residual_block.4} parent=27 // pred_check
        %p297 = pneg %p116
      $region38: #{residual_block.4} parent=27 // pred_check_branch
        %299 = sbr.rel (%p297) target = $region40
      $region39: #{residual_block.4} parent=27 // pred_region
        %s300 = sadd.s32 %s22, 1
        %p301 = scmp.lt.s32.totalorder %s300, 1
        %s302 = scalar_select %p301, %s300, 1
        %p303 = scmp.lt.s32.totalorder %s21, 1
        %s304 = scalar_select %p303, %s21, 1
        %p305 = scmp.lt.s32.totalorder %s302, 1
        %s306 = scalar_select %p305, %s302, 1
        %s307 = smul.addr %s304, 2
        %s308 = sadd.s32 %s306, %s307
        %s309 = smul.addr %s308, 2
        %s310 = scalar_lea.vmem %s2, %s309
        %s311 = sadd.s32 %s22, 1
        %p312 = scmp.lt.s32.totalorder %s311, 1
        %s313 = scalar_select %p312, %s311, 1
      $region40: #{residual_block.4} parent=27 // pred_fallthru
        _
    $region28: #{residual_block.4} parent=5 // pred_fallthru
      _
    %p314 = scmp.le.s32.totalorder 1, %s14
    %p315 = scmp.lt.s32.totalorder %s14, 5
    %p316 = pnand %p314, %p315
    %p317 = pneg %p316
    // Predicated region
    $region41: #{residual_block.4} parent=5 // pred_check
      _
    $region42: #{residual_block.4} parent=5 // pred_check_branch
      %319 = sbr.rel (%p316) target = $region44
    $region43: #{residual_block.4} parent=5 // pred_region
      %s320 = ssub.s32 %s14, 1
      %p321 = scmp.lt.s32.totalorder %s23, 1
      %s322 = scalar_select %p321, %s23, 1
      %p323 = scmp.lt.s32.totalorder %s24, 1
      %s324 = scalar_select %p323, %s24, 1
      %s325 = smul.addr %s322, 2
      %s326 = sadd.s32 %s324, %s325
      %s327 = smul.addr %s326, 2
      %s328 = scalar_lea.vmem %s0, %s327
      %p329 = pneg %p54
      %p330 = pneg %p51
      %s331 = ssub.s32 %s24, 1
      %p332 = scmp.gt.s32.totalorder %s331, 0
      %s333 = scalar_select %p332, %s331, 0
      %p334 = scmp.lt.s32.totalorder %s23, 1
      %s335 = scalar_select %p334, %s23, 1
      %p336 = scmp.lt.s32.totalorder %s333, 1
      %s337 = scalar_select %p336, %s333, 1
      %s338 = smul.addr %s335, 2
      %s339 = sadd.s32 %s337, %s338
      %s340 = smul.addr %s339, 2
      %s341 = scalar_lea.vmem %s1, %s340
      %p342 = pneg %p88
      %p343 = pneg %p85
      %s344 = sadd.s32 %s24, 1
      %p345 = scmp.lt.s32.totalorder %s344, 1
      %s346 = scalar_select %p345, %s344, 1
      %p347 = scmp.lt.s32.totalorder %s23, 1
      %s348 = scalar_select %p347, %s23, 1
      %p349 = scmp.lt.s32.totalorder %s346, 1
      %s350 = scalar_select %p349, %s346, 1
      %s351 = smul.addr %s348, 2
      %s352 = sadd.s32 %s350, %s351
      %s353 = smul.addr %s352, 2
      %s354 = scalar_lea.vmem %s2, %s353
      %p355 = pneg %p122
      %p356 = pneg %p119
      %p357 = pneg %p143
      %p358 = pneg %p140
      %p359 = pneg %p164
      %p360 = pneg %p161
      %p361 = pneg %p185
      %p362 = pneg %p182
      %p363 = pneg %p213
      %p364 = pneg %p210
      %p365 = scmp.lt.s32.totalorder %s23, 1
      %s366 = scalar_select %p365, %s23, 1
      %p367 = scmp.lt.s32.totalorder %s24, 1
      %s368 = scalar_select %p367, %s24, 1
      %s369 = smul.addr %s366, 2
      %s370 = sadd.s32 %s368, %s369
      %s371 = smul.addr %s370, 4
      %s372 = scalar_lea.vmem %s6, %s371
      %p373 = pneg %p241
      %p374 = pneg %p238
      %p375 = scmp.lt.s32.totalorder %s23, 1
      %s376 = scalar_select %p375, %s23, 1
      %p377 = scmp.lt.s32.totalorder %s24, 1
      %s378 = scalar_select %p377, %s24, 1
      %s379 = smul.addr %s376, 2
      %s380 = sadd.s32 %s378, %s379
      %s381 = smul.addr %s380, 4
      %s382 = scalar_lea.vmem %s7, %s381
      %p383 = scmp.lt.s32.totalorder %s23, 1
      %s384 = scalar_select %p383, %s23, 1
      %p385 = scmp.lt.s32.totalorder %s24, 1
      %s386 = scalar_select %p385, %s24, 1
      %s387 = smul.addr %s384, 2
      %s388 = sadd.s32 %s386, %s387
      %s389 = smul.addr %s388, 2
      %s390 = scalar_lea.vmem %s0, %s389
      %s391 = ssub.s32 %s24, 1
      %p392 = scmp.gt.s32.totalorder %s391, 0
      %s393 = scalar_select %p392, %s391, 0
      %p394 = scmp.lt.s32.totalorder %s23, 1
      %s395 = scalar_select %p394, %s23, 1
      %p396 = scmp.lt.s32.totalorder %s393, 1
      %s397 = scalar_select %p396, %s393, 1
      %s398 = smul.addr %s395, 2
      %s399 = sadd.s32 %s397, %s398
      %s400 = smul.addr %s399, 2
      %s401 = scalar_lea.vmem %s1, %s400
      %s402 = ssub.s32 %s24, 1
      %p403 = scmp.gt.s32.totalorder %s402, 0
      %s404 = scalar_select %p403, %s402, 0
      %s405 = sadd.s32 %s24, 1
      %p406 = scmp.lt.s32.totalorder %s405, 1
      %s407 = scalar_select %p406, %s405, 1
      %p408 = scmp.lt.s32.totalorder %s23, 1
      %s409 = scalar_select %p408, %s23, 1
      %p410 = scmp.lt.s32.totalorder %s407, 1
      %s411 = scalar_select %p410, %s407, 1
      %s412 = smul.addr %s409, 2
      %s413 = sadd.s32 %s411, %s412
      %s414 = smul.addr %s413, 2
      %s415 = scalar_lea.vmem %s2, %s414
      %s416 = sadd.s32 %s24, 1
      %p417 = scmp.lt.s32.totalorder %s416, 1
      %s418 = scalar_select %p417, %s416, 1
      %p419 = scmp.lt.s32.totalorder %s23, 1
      %s420 = scalar_select %p419, %s23, 1
      %p421 = scmp.lt.s32.totalorder %s24, 1
      %s422 = scalar_select %p421, %s24, 1
      %s423 = smul.addr %s420, 2
      %s424 = sadd.s32 %s422, %s423
      %s425 = smul.addr %s424, 4
      %s426 = scalar_lea.vmem %s6, %s425
      %p427 = scmp.lt.s32.totalorder %s23, 1
      %s428 = scalar_select %p427, %s23, 1
      %p429 = scmp.lt.s32.totalorder %s24, 1
      %s430 = scalar_select %p429, %s24, 1
      %s431 = smul.addr %s428, 2
      %s432 = sadd.s32 %s430, %s431
      %s433 = smul.addr %s432, 4
      %s434 = scalar_lea.vmem %s7, %s433
      %v435 = vld [vmem:[%s4] sm:$0x3]
      %v436 = vld [vmem:[%s5] sm:$0x3]
      %v437 = vlaneseq
      %v438 = vand.u32 %v437, 127
      %s439 = smul.u32 %s24, 128
      %v440 = vstv %s439
      %v441 = vadd.s32 %v440, %v438
      %vm442 = vcmp.lt.s32.totalorder %v441, 256
      %vm443 = vcmp.lt.s32.totalorder %v438, 0
      %v444 = vsub.s32 0, %v438
      %v445 = vsel %vm443, %v444, %v438
      %v446 = vshrl.u32 %v445, 4
      %v447 = vand.u32 %v445, 15
      %v448 = vsub.s32 0, %v447
      %v449 = vsel %vm443, %v448, %v447
      %vm450 = vcmp.ne.s32.totalorder %v449, 0
      %vm451 = vcmp.lt.s32.totalorder %v449, 0
      %vm452 = vmand %vm451, %vm450
      %v453 = vadd.s32 %v449, 16
      %v454 = vsel %vm452, %v453, %v449
      %vm455 = vcmp.gt.s32.totalorder %v454, 0
      %vm456 = vcmp.lt.s32.totalorder %v454, 15
      %v457 = vld [vmem:[%s390] sm:$0x3]
      %459 = vset.pattern.permute.xlu0 0
      %460 = vperm.xlu0 %459, %v435
      %v461 = vpop.permute.xlu0 %460
      %v463 = vmul.f32 %v457, %v461
      %465 = vset.pattern.permute.xlu0 0
      %466 = vperm.xlu0 %465, %v436
      %v467 = vpop.permute.xlu0 %466
      %v469 = vadd.f32 %v463, %v467
      %vm470 = vcmp.gt.f32.partialorder %v469, 0.0
      %v471 = vmul.f32 %v469, 0.1
      %v472 = vsel %vm470, %v469, %v471
      %v473 = vsel %vm442, 1, 0
      %vm474 = vcmp.eq.s32.totalorder %v473, 1
      %v475 = vsel %vm474, %v472, 0.0
      %p476 = scmp.gt.s32.totalorder %s24, 0
      %v477 = vld [vmem:[%s401] sm:$0x3]
      %v478 = vmul.f32 %v477, %v461
      %v479 = vadd.f32 %v478, %v467
      %vm480 = vcmp.gt.f32.partialorder %v479, 0.0
      %v481 = vmul.f32 %v479, 0.1
      %v482 = vsel %vm480, %v479, %v481
      %s483 = scalar_select %p476, 1, 0
      %v484 = vstv %s483
      %vm485 = vcmp.eq.s32.totalorder %v484, 1
      %v486 = vsel %vm485, %v482, 0.0
      %p487 = scmp.lt.s32.totalorder %s24, 1
      %v488 = vld [vmem:[%s415] sm:$0x3]
      %v489 = vmul.f32 %v488, %v461
      %v490 = vadd.f32 %v489, %v467
      %vm491 = vcmp.gt.f32.partialorder %v490, 0.0
      %v492 = vmul.f32 %v490, 0.1
      %v493 = vsel %vm491, %v490, %v492
      %s494 = scalar_select %p487, 1, 0
      %v495 = vstv %s494
      %vm496 = vcmp.eq.s32.totalorder %v495, 1
      %v497 = vsel %vm496, %v493, 0.0
      %499 = vrot.lane.b32.xlu0 %v486, 16
      %v500 = vpop.permute.xlu0 %499
      %503 = vrot.lane.b32.xlu0 %v475, 16
      %v504 = vpop.permute.xlu0 %503
      %507 = vrot.lane.b32.xlu0 %v497, 16
      %v508 = vpop.permute.xlu0 %507
      %vm510 = vcmask 130048
      %v511 = vsel %vm510, %v500, %v504
      %v512 = vsel %vm510, %v504, %v508
      %513 = vrot.lane.b32.xlu0 %v511, 1
      %v514 = vpop.permute.xlu0 %513
      %v515 = vsel %vm455, 1, 0
      %vm516 = vcmp.eq.s32.totalorder %v515, 1
      %v517 = vsel %vm516, %v514, 0.0
      %518 = vrot.lane.b32.xlu0 %v511, 127
      %v519 = vpop.permute.xlu0 %518
      %v520 = vsel %vm456, 1, 0
      %vm521 = vcmp.eq.s32.totalorder %v520, 1
      %v522 = vsel %vm521, %v519, 0.0
      %523 = vrot.lane.b32.xlu0 %v475, 1
      %v524 = vpop.permute.xlu0 %523
      %v525 = vsel %vm516, %v524, 0.0
      %526 = vrot.lane.b32.xlu0 %v475, 127
      %v527 = vpop.permute.xlu0 %526
      %v528 = vsel %vm521, %v527, 0.0
      %531 = vrot.lane.b32.xlu0 %v511, 96
      %v532 = vpop.permute.xlu0 %531
      %533 = vrot.lane.b32.xlu0 %v512, 96
      %v534 = vpop.permute.xlu0 %533
      %vm535 = vcmask 785408
      %v536 = vsel %vm535, %v532, %v534
      %538 = vrot.lane.b32.xlu0 %v536, 1
      %v539 = vpop.permute.xlu0 %538
      %v540 = vsel %vm516, %v539, 0.0
      %541 = vrot.lane.b32.xlu0 %v536, 127
      %v542 = vpop.permute.xlu0 %541
      %v543 = vsel %vm521, %v542, 0.0
      %v544 = vrot.slane %v511, 6
      %v547 = vrot.slane %v522, 4
      %v550 = vrot.slane %v525, 2
      %v553 = vrot.slane %v528, 6
      %v556 = vrot.slane %v540, 4
      %v558 = vrot.slane %v511, 2
      %v559 = vrot.slane %v512, 2
      %560 = vrot.lane.b32.xlu0 %v558, 96
      %v561 = vpop.permute.xlu0 %560
      %562 = vrot.lane.b32.xlu0 %v559, 96
      %v563 = vpop.permute.xlu0 %562
      %v564 = vsel %vm535, %v561, %v563
      %vm566 = vcmask 1041408
      %v567 = vsel %vm566, %v517, %v544
      %vm568 = vcmask 1043456
      %v569 = vsel %vm568, %v567, %v547
      %vm570 = vcmask 1045504
      %v571 = vsel %vm570, %v569, %v550
      %v572 = vsel %vm566, %v475, %v553
      %v573 = vsel %vm568, %v572, %v556
      %v574 = vsel %vm570, %v573, %v564
      %v575 = vld [vmem:[%s3] sm:$0xf]
      %vm576 = vcmask 146432
      %v578 = vsel %vm576, %v575, 0
      %v581 = vsel %vm566, %v543, 0
      %583 = vmatpush.msra.mxu0 0.0
      %584 = vmatpush.msra.mxu0 0.0
      %585 = vmatpush.msra.mxu0 0.0
      %586 = vmatpush.msra.mxu0 0.0
      %587 = vmatpush.msra.mxu0 0.0
      %588 = vmatpush.msra.mxu0 0.0
      %589 = vmatpush.msra.mxu0 0.0
      %590 = vmatpush.msra.mxu0 0.0
      %591 = vmatpush.msra.mxu0 0.0
      %592 = vmatpush.msra.mxu0 0.0
      %593 = vmatpush.msra.mxu0 0.0
      %594 = vmatpush.msra.mxu0 0.0
      %595 = vmatpush.msra.mxu0 0.0
      %596 = vmatpush.msra.mxu0 %v581
      %597 = vmatpush.msra.mxu0 %v574
      %598 = vmatpush.msra.mxu0 %v571
      %599 = vmatmul.f32.gmra.mxu0 %v578
      %v600 = vpop.f32.mrf.mxu0
      %v601 = vadd.f32 0.0, %v600
      %602 = vdwg.mxu0
      %v603 = vsel %vm474, %v601, 0.0
      %604 = vst [vmem:[%s426] sm:$0xf] %v603
      %v605 = vsel %vm568, %v603, 0.0
      %606 = vadd.xlane.f32.xlu0 %v605
      %v607 = vpop.xlane.xlu0 %606
      %vm608 = vcmask 3072
      %609 = vst.msk [vmem:[%s434] sm:$0xf] %vm608, %v607
      %v610 = vmul.f32 %v603, %v603
      %v611 = vsel %vm568, %v610, 0.0
      %612 = vadd.xlane.f32.xlu0 %v611
      %v613 = vpop.xlane.xlu0 %612
      %vm614 = vcmask 11272
      %615 = vst.msk [vmem:[%s434] sm:$0xf] %vm614, %v613
      %p616 = scmp.lt.s32.totalorder %s23, 1
      %s617 = scalar_select %p616, %s23, 1
      %p618 = scmp.lt.s32.totalorder %s24, 1
      %s619 = scalar_select %p618, %s24, 1
      %s620 = smul.addr %s617, 2
      %s621 = sadd.s32 %s619, %s620
      %s622 = smul.addr %s621, 4
      %s623 = scalar_lea.vmem %s6, %s622
      %p624 = scmp.lt.s32.totalorder %s23, 1
      %s625 = scalar_select %p624, %s23, 1
      %p626 = scmp.lt.s32.totalorder %s24, 1
      %s627 = scalar_select %p626, %s24, 1
      %s628 = smul.addr %s625, 2
      %s629 = sadd.s32 %s627, %s628
      %s630 = smul.addr %s629, 4
      %s631 = scalar_lea.vmem %s7, %s630
      // Predicated region
      $region45: #{residual_block.4} parent=43 // pred_check
        %p632 = pneg %p210
      $region46: #{residual_block.4} parent=43 // pred_check_branch
        %634 = sbr.rel (%p632) target = $region48
      $region47: #{residual_block.4} parent=43 // pred_region
        _
      $region48: #{residual_block.4} parent=43 // pred_fallthru
        _
      // Predicated region
      $region49: #{residual_block.4} parent=43 // pred_check
        %p635 = pneg %p238
      $region50: #{residual_block.4} parent=43 // pred_check_branch
        %637 = sbr.rel (%p635) target = $region52
      $region51: #{residual_block.4} parent=43 // pred_region
        _
      $region52: #{residual_block.4} parent=43 // pred_fallthru
        _
    $region44: #{residual_block.4} parent=5 // pred_fallthru
      _
    %p638 = scmp.le.s32.totalorder 2, %s14
    // Predicated region
    $region53: #{residual_block.4} parent=5 // pred_check
      %p639 = pneg %p638
    $region54: #{residual_block.4} parent=5 // pred_check_branch
      %641 = sbr.rel (%p639) target = $region56
    $region55: #{residual_block.4} parent=5 // pred_region
      %s642 = ssub.s32 %s14, 2
      // Predicated region
      $region57: #{residual_block.4} parent=55 // pred_check
        %p643 = pneg %p216
      $region58: #{residual_block.4} parent=55 // pred_check_branch
        %645 = sbr.rel (%p643) target = $region60
      $region59: #{residual_block.4} parent=55 // pred_region
        %p646 = scmp.lt.s32.totalorder %s25, 1
        %s647 = scalar_select %p646, %s25, 1
        %p648 = scmp.lt.s32.totalorder %s26, 1
        %s649 = scalar_select %p648, %s26, 1
        %s650 = smul.addr %s647, 2
        %s651 = sadd.s32 %s649, %s650
        %s652 = smul.addr %s651, 4
        %s653 = scalar_lea.vmem %s6, %s652
      $region60: #{residual_block.4} parent=55 // pred_fallthru
        _
      // Predicated region
      $region61: #{residual_block.4} parent=55 // pred_check
        %p654 = pneg %p244
      $region62: #{residual_block.4} parent=55 // pred_check_branch
        %656 = sbr.rel (%p654) target = $region64
      $region63: #{residual_block.4} parent=55 // pred_region
        %p657 = scmp.lt.s32.totalorder %s25, 1
        %s658 = scalar_select %p657, %s25, 1
        %p659 = scmp.lt.s32.totalorder %s26, 1
        %s660 = scalar_select %p659, %s26, 1
        %s661 = smul.addr %s658, 2
        %s662 = sadd.s32 %s660, %s661
        %s663 = smul.addr %s662, 4
        %s664 = scalar_lea.vmem %s7, %s663
      $region64: #{residual_block.4} parent=55 // pred_fallthru
        _
    $region56: #{residual_block.4} parent=5 // pred_fallthru
      _
  $region6: #{residual_block.4} parent=0 // loop_footer
    %s18 = sadd.s32 1, %s14
  $region7: #{residual_block.4} parent=0 // loop_footer_branch
    %13 = sbr.rel target = $region3
  $region8: #{residual_block.4} parent=0 // loop_exit
    _

// kernel: residual_block.5
$region0: #{residual_block.5}
  #allocation0 [shape = 'u32[]', space=smem, size = 0x4, offset = 0x4, fixed_abs, tag = 'smem constant byte address 0x4 - core index']
  #allocation1 [shape = 'u32[72,128]{1,0:T(1,128)}', space=vmem, size = 0x9000, scoped, tag = 'internal scratch']
  %s0 = inlined_call_operand.vmem [shape: f32[2,4,256], index: 0, kind: input, shape index: {}]
  %s1 = inlined_call_operand.vmem [shape: f32[2,4,256], index: 1, kind: input, shape index: {}]
  %s2 = inlined_call_operand.vmem [shape: f32[4,1], index: 2, kind: input, shape index: {}]
  %s3 = inlined_call_operand.vmem [shape: f32[4,1], index: 3, kind: input, shape index: {}]
  %s4 = inlined_call_operand.vmem [shape: f32[2,4,256], index: 4, kind: output, shape index: {}]
  %s5 = sld [smem:[#allocation0]]
  $region49: #{residual_block.5} parent=0
    _
  %s7 = ssub.s32 1, %s5
  %s8 = scalar_select 0, %s7, %s5
  loop: start=0, step=1, limit=4
  $region2: #{residual_block.5} parent=0 // loop_pre_header
    _
  $region3: #{residual_block.5} parent=0 // loop_header
    %s10 = sphi 0, %s14
    %p11 = scmp.ge.s32.totalorder %s10, 4
    %s17 = sphi 0, %s29
    %s18 = sphi 0, %s25
    %s19 = sphi 0, %s17
    %s20 = sphi 0, %s18
    %s21 = sphi 0, %s19
    %s22 = sphi 0, %s20
    %s34 = sphi 0, %s36
    %s37 = sphi 0, %s34
    %s38 = sphi 0, %s37
    %s54 = sphi 0, %s38
    %s62 = sphi 0, %s64
    %s65 = sphi 0, %s62
    %s66 = sphi 0, %s65
    %s82 = sphi 0, %s66
    %s86 = sphi 0, %s86
    %s88 = sphi 0, %s86
    %s89 = sphi 0, %s88
    %s103 = sphi 0, %s89
    %s107 = sphi 0, %s107
    %s109 = sphi 0, %s107
    %s110 = sphi 0, %s109
    %s124 = sphi 0, %s110
    %s132 = sphi 0, %s134
    %s135 = sphi 0, %s132
    %s136 = sphi 0, %s135
    %s152 = sphi 0, %s136
  $region4: #{residual_block.5} parent=0 // loop_header_branch
    %13 = sbr.rel (%p11) target = $region8
  $region5: #{residual_block.5} parent=0 // loop_body
    %s15 = ssub.s32 %s10, 1
    %s16 = ssub.s32 %s10, 2
    %s23 = sadd.s32 1, %s18
    %p24 = scmp.ge.s32.totalorder %s23, 1
    %s25 = scalar_select %p24, 0, %s23
    %s26 = sadd.s32 1, %s17
    %s27 = scalar_select %p24, %s26, %s17
    %p28 = scmp.ge.s32.totalorder %s27, 2
    %s29 = scalar_select %p28, 0, %s27
    %s30 = ssub.s32 %s17, %s29
    %s31 = ssub.s32 %s18, %s25
    %s32 = sor.u32 %s30, %s31
    %p33 = scmp.eq.s32.totalorder %s32, 0
    %s35 = sadd.s32 %s34, 1
    %s36 = scalar_select %p33, %s34, %s35
    %p39 = pneg %p33
    %p40 = scmp.eq.s32.totalorder %s10, 1
    %p41 = por %p39, %p40
    %p42 = scmp.ne.s32.totalorder %s34, %s37
    %p43 = scmp.eq.s32.totalorder %s10, 0
    %p44 = por %p42, %p43
    %p45 = scmp.ne.s32.totalorder %s34, %s37
    %p46 = scmp.eq.s32.totalorder %s15, 1
    %p47 = por %p45, %p46
    %p48 = scmp.ne.s32.totalorder %s37, %s38
    %p49 = scmp.eq.s32.totalorder %s15, 0
    %p50 = por %p48, %p49
    %p51 = scmp.ne.s32.totalorder %s37, %s38
    %p52 = scmp.eq.s32.totalorder %s16, 1
    %p53 = por %p51, %p52
    %p55 = scmp.ne.s32.totalorder %s38, %s54
    %p56 = scmp.eq.s32.totalorder %s16, 0
    %p57 = por %p55, %p56
    %s58 = ssub.s32 %s17, %s29
    %s59 = ssub.s32 %s18, %s25
    %s60 = sor.u32 %s58, %s59
    %p61 = scmp.eq.s32.totalorder %s60, 0
    %s63 = sadd.s32 %s62, 1
    %s64 = scalar_select %p61, %s62, %s63
    %p67 = pneg %p61
    %p68 = scmp.eq.s32.totalorder %s10, 1
    %p69 = por %p67, %p68
    %p70 = scmp.ne.s32.totalorder %s62, %s65
    %p71 = scmp.eq.s32.totalorder %s10, 0
    %p72 = por %p70, %p71
    %p73 = scmp.ne.s32.totalorder %s62, %s65
    %p74 = scmp.eq.s32.totalorder %s15, 1
    %p75 = por %p73, %p74
    %p76 = scmp.ne.s32.totalorder %s65, %s66
    %p77 = scmp.eq.s32.totalorder %s15, 0
    %p78 = por %p76, %p77
    %p79 = scmp.ne.s32.totalorder %s65, %s66
    %p80 = scmp.eq.s32.totalorder %s16, 1
    %p81 = por %p79, %p80
    %p83 = scmp.ne.s32.totalorder %s66, %s82
    %p84 = scmp.eq.s32.totalorder %s16, 0
    %p85 = por %p83, %p84
    %s87 = sadd.s32 %s86, 1
    %p90 = scmp.eq.s32.totalorder %s10, 1
    %p91 = scmp.ne.s32.totalorder %s86, %s88
    %p92 = scmp.eq.s32.totalorder %s10, 0
    %p93 = por %p91, %p92
    %p94 = scmp.ne.s32.totalorder %s86, %s88
    %p95 = scmp.eq.s32.totalorder %s15, 1
    %p96 = por %p94, %p95
    %p97 = scmp.ne.s32.totalorder %s88, %s89
    %p98 = scmp.eq.s32.totalorder %s15, 0
    %p99 = por %p97, %p98
    %p100 = scmp.ne.s32.totalorder %s88, %s89
    %p101 = scmp.eq.s32.totalorder %s16, 1
    %p102 = por %p100, %p101
    %p104 = scmp.ne.s32.totalorder %s89, %s103
    %p105 = scmp.eq.s32.totalorder %s16, 0
    %p106 = por %p104, %p105
    %s108 = sadd.s32 %s107, 1
    %p111 = scmp.eq.s32.totalorder %s10, 1
    %p112 = scmp.ne.s32.totalorder %s107, %s109
    %p113 = scmp.eq.s32.totalorder %s10, 0
    %p114 = por %p112, %p113
    %p115 = scmp.ne.s32.totalorder %s107, %s109
    %p116 = scmp.eq.s32.totalorder %s15, 1
    %p117 = por %p115, %p116
    %p118 = scmp.ne.s32.totalorder %s109, %s110
    %p119 = scmp.eq.s32.totalorder %s15, 0
    %p120 = por %p118, %p119
    %p121 = scmp.ne.s32.totalorder %s109, %s110
    %p122 = scmp.eq.s32.totalorder %s16, 1
    %p123 = por %p121, %p122
    %p125 = scmp.ne.s32.totalorder %s110, %s124
    %p126 = scmp.eq.s32.totalorder %s16, 0
    %p127 = por %p125, %p126
    %s128 = ssub.s32 %s17, %s29
    %s129 = ssub.s32 %s18, %s25
    %s130 = sor.u32 %s128, %s129
    %p131 = scmp.eq.s32.totalorder %s130, 0
    %s133 = sadd.s32 %s132, 1
    %s134 = scalar_select %p131, %s132, %s133
    %p137 = pneg %p131
    %p138 = scmp.eq.s32.totalorder %s10, 1
    %p139 = por %p137, %p138
    %p140 = scmp.ne.s32.totalorder %s132, %s135
    %p141 = scmp.eq.s32.totalorder %s10, 0
    %p142 = por %p140, %p141
    %p143 = scmp.ne.s32.totalorder %s132, %s135
    %p144 = scmp.eq.s32.totalorder %s15, 1
    %p145 = por %p143, %p144
    %p146 = scmp.ne.s32.totalorder %s135, %s136
    %p147 = scmp.eq.s32.totalorder %s15, 0
    %p148 = por %p146, %p147
    %p149 = scmp.ne.s32.totalorder %s135, %s136
    %p150 = scmp.eq.s32.totalorder %s16, 1
    %p151 = por %p149, %p150
    %p153 = scmp.ne.s32.totalorder %s136, %s152
    %p154 = scmp.eq.s32.totalorder %s16, 0
    %p155 = por %p153, %p154
    %p156 = scmp.le.s32.totalorder 1, %s10
    %p157 = scmp.lt.s32.totalorder %s10, 3
    %p158 = pnand %p156, %p157
    %p159 = pneg %p158
    // Predicated region
    $region9: #{residual_block.5} parent=5 // pred_check
      _
    $region10: #{residual_block.5} parent=5 // pred_check_branch
      %161 = sbr.rel (%p158) target = $region12
    $region11: #{residual_block.5} parent=5 // pred_region
      %s162 = ssub.s32 %s10, 1
      // Predicated region
      $region13: #{residual_block.5} parent=11 // pred_check
        %p163 = pneg %p99
      $region14: #{residual_block.5} parent=11 // pred_check_branch
        %165 = sbr.rel (%p163) target = $region16
      $region15: #{residual_block.5} parent=11 // pred_region
        _
      $region16: #{residual_block.5} parent=11 // pred_fallthru
        _
      // Predicated region
      $region17: #{residual_block.5} parent=11 // pred_check
        %p166 = pneg %p120
      $region18: #{residual_block.5} parent=11 // pred_check_branch
        %168 = sbr.rel (%p166) target = $region20
      $region19: #{residual_block.5} parent=11 // pred_region
        _
      $region20: #{residual_block.5} parent=11 // pred_fallthru
        _
    $region12: #{residual_block.5} parent=5 // pred_fallthru
      _
    %p169 = scmp.lt.s32.totalorder %s10, 2
    // Predicated region
    $region21: #{residual_block.5} parent=5 // pred_check
      %p170 = pneg %p169
    $region22: #{residual_block.5} parent=5 // pred_check_branch
      %172 = sbr.rel (%p170) target = $region24
    $region23: #{residual_block.5} parent=5 // pred_region
      // Predicated region
      $region25: #{residual_block.5} parent=23 // pred_check
        %p173 = pneg %p44
      $region26: #{residual_block.5} parent=23 // pred_check_branch
        %175 = sbr.rel (%p173) target = $region28
      $region27: #{residual_block.5} parent=23 // pred_region
        %s176 = smul.u32 2, %s18
        %p177 = scmp.lt.s32.totalorder %s17, 1
        %s178 = scalar_select %p177, %s17, 1
        %p179 = scmp.lt.s32.totalorder %s176, 1
        %s180 = scalar_select %p179, %s176, 1
        %s181 = smul.addr %s178, 2
        %s182 = sadd.s32 %s180, %s181
        %s183 = smul.addr %s182, 4
        %s184 = scalar_lea.vmem %s0, %s183
        %s185 = smul.u32 2, %s18
      $region28: #{residual_block.5} parent=23 // pred_fallthru
        _
      // Predicated region
      $region29: #{residual_block.5} parent=23 // pred_check
        %p186 = pneg %p72
      $region30: #{residual_block.5} parent=23 // pred_check_branch
        %188 = sbr.rel (%p186) target = $region32
      $region31: #{residual_block.5} parent=23 // pred_region
        %s189 = smul.u32 2, %s18
        %p190 = scmp.lt.s32.totalorder %s17, 1
        %s191 = scalar_select %p190, %s17, 1
        %p192 = scmp.lt.s32.totalorder %s189, 1
        %s193 = scalar_select %p192, %s189, 1
        %s194 = smul.addr %s191, 2
        %s195 = sadd.s32 %s193, %s194
        %s196 = smul.addr %s195, 4
        %s197 = scalar_lea.vmem %s1, %s196
        %s198 = smul.u32 2, %s18
      $region32: #{residual_block.5} parent=23 // pred_fallthru
        _
    $region24: #{residual_block.5} parent=5 // pred_fallthru
      _
    %p199 = scmp.le.s32.totalorder 1, %s10
    %p200 = scmp.lt.s32.totalorder %s10, 3
    %p201 = pnand %p199, %p200
    %p202 = pneg %p201
    // Predicated region
    $region33: #{residual_block.5} parent=5 // pred_check
      _
    $region34: #{residual_block.5} parent=5 // pred_check_branch
      %204 = sbr.rel (%p201) target = $region36
    $region35: #{residual_block.5} parent=5 // pred_region
      %s205 = ssub.s32 %s10, 1
      %s206 = smul.u32 2, %s20
      %p207 = scmp.lt.s32.totalorder %s19, 1
      %s208 = scalar_select %p207, %s19, 1
      %p209 = scmp.lt.s32.totalorder %s206, 1
      %s210 = scalar_select %p209, %s206, 1
      %s211 = smul.addr %s208, 2
      %s212 = sadd.s32 %s210, %s211
      %s213 = smul.addr %s212, 4
      %s214 = scalar_lea.vmem %s0, %s213
      %p215 = pneg %p50
      %p216 = pneg %p47
      %s217 = smul.u32 2, %s20
      %p218 = scmp.lt.s32.totalorder %s19, 1
      %s219 = scalar_select %p218, %s19, 1
      %p220 = scmp.lt.s32.totalorder %s217, 1
      %s221 = scalar_select %p220, %s217, 1
      %s222 = smul.addr %s219, 2
      %s223 = sadd.s32 %s221, %s222
      %s224 = smul.addr %s223, 4
      %s225 = scalar_lea.vmem %s1, %s224
      %p226 = pneg %p78
      %p227 = pneg %p75
      %p228 = pneg %p99
      %p229 = pneg %p96
      %p230 = pneg %p120
      %p231 = pneg %p117
      %p232 = pneg %p148
      %p233 = pneg %p145
      %s234 = smul.u32 2, %s20
      %p235 = scmp.lt.s32.totalorder %s19, 1
      %s236 = scalar_select %p235, %s19, 1
      %p237 = scmp.lt.s32.totalorder %s234, 1
      %s238 = scalar_select %p237, %s234, 1
      %s239 = smul.addr %s236, 2
      %s240 = sadd.s32 %s238, %s239
      %s241 = smul.addr %s240, 4
      %s242 = scalar_lea.vmem %s4, %s241
      %s243 = smul.u32 2, %s20
      %p244 = scmp.lt.s32.totalorder %s19, 1
      %s245 = scalar_select %p244, %s19, 1
      %p246 = scmp.lt.s32.totalorder %s243, 1
      %s247 = scalar_select %p246, %s243, 1
      %s248 = smul.addr %s245, 2
      %s249 = sadd.s32 %s247, %s248
      %s250 = smul.addr %s249, 4
      %s251 = scalar_lea.vmem %s0, %s250
      %s252 = smul.u32 2, %s20
      %s253 = smul.u32 2, %s20
      %p254 = scmp.lt.s32.totalorder %s19, 1
      %s255 = scalar_select %p254, %s19, 1
      %p256 = scmp.lt.s32.totalorder %s253, 1
      %s257 = scalar_select %p256, %s253, 1
      %s258 = smul.addr %s255, 2
      %s259 = sadd.s32 %s257, %s258
      %s260 = smul.addr %s259, 4
      %s261 = scalar_lea.vmem %s1, %s260
      %s262 = smul.u32 2, %s20
      %s263 = smul.u32 2, %s20
      %p264 = scmp.lt.s32.totalorder %s19, 1
      %s265 = scalar_select %p264, %s19, 1
      %p266 = scmp.lt.s32.totalorder %s263, 1
      %s267 = scalar_select %p266, %s263, 1
      %s268 = smul.addr %s265, 2
      %s269 = sadd.s32 %s267, %s268
      %s270 = smul.addr %s269, 4
      %s271 = scalar_lea.vmem %s4, %s270
      %s272 = smul.u32 2, %s20
      %v273 = vld [vmem:[%s251] sm:$0xff]
      %v274 = vld [vmem:[%s2] sm:$0xf]
      %276 = vset.pattern.permute.xlu0 0
      %277 = vperm.xlu0 %276, %v274
      %v278 = vpop.permute.xlu0 %277
      %v280 = vunpack.c.l.s4 839922192
      %v281 = vunpack.c.0.s8 %v280
      %v282 = vperm.slane %v278, %v281
      %v284 = vmul.f32 %v273, %v282
      %v285 = vld [vmem:[%s3] sm:$0xf]
      %287 = vset.pattern.permute.xlu0 0
      %288 = vperm.xlu0 %287, %v285
      %v289 = vpop.permute.xlu0 %288
      %v291 = vunpack.c.l.s4 839922192
      %v292 = vunpack.c.0.s8 %v291
      %v293 = vperm.slane %v289, %v292
      %v295 = vadd.f32 %v284, %v293
      %v296 = vld [vmem:[%s261] sm:$0xff]
      %v297 = vadd.f32 %v295, %v296
      %vm298 = vcmp.gt.f32.partialorder %v297, 0.0
      %v299 = vmul.f32 %v297, 0.1
      %v300 = vsel %vm298, %v297, %v299
      %301 = vst [vmem:[%s271] sm:$0xff] %v300
      %s302 = smul.u32 2, %s20
      %p303 = scmp.lt.s32.totalorder %s19, 1
      %s304 = scalar_select %p303, %s19, 1
      %p305 = scmp.lt.s32.totalorder %s302, 1
      %s306 = scalar_select %p305, %s302, 1
      %s307 = smul.addr %s304, 2
      %s308 = sadd.s32 %s306, %s307
      %s309 = smul.addr %s308, 4
      %s310 = scalar_lea.vmem %s4, %s309
      // Predicated region
      $region37: #{residual_block.5} parent=35 // pred_check
        %p311 = pneg %p145
      $region38: #{residual_block.5} parent=35 // pred_check_branch
        %313 = sbr.rel (%p311) target = $region40
      $region39: #{residual_block.5} parent=35 // pred_region
        %s314 = smul.u32 2, %s20
      $region40: #{residual_block.5} parent=35 // pred_fallthru
        _
    $region36: #{residual_block.5} parent=5 // pred_fallthru
      _
    %p315 = scmp.le.s32.totalorder 2, %s10
    // Predicated region
    $region41: #{residual_block.5} parent=5 // pred_check
      %p316 = pneg %p315
    $region42: #{residual_block.5} parent=5 // pred_check_branch
      %318 = sbr.rel (%p316) target = $region44
    $region43: #{residual_block.5} parent=5 // pred_region
      %s319 = ssub.s32 %s10, 2
      // Predicated region
      $region45: #{residual_block.5} parent=43 // pred_check
        %p320 = pneg %p151
      $region46: #{residual_block.5} parent=43 // pred_check_branch
        %322 = sbr.rel (%p320) target = $region48
      $region47: #{residual_block.5} parent=43 // pred_region
        %s323 = smul.u32 2, %s22
        %p324 = scmp.lt.s32.totalorder %s21, 1
        %s325 = scalar_select %p324, %s21, 1
        %p326 = scmp.lt.s32.totalorder %s323, 1
        %s327 = scalar_select %p326, %s323, 1
        %s328 = smul.addr %s325, 2
        %s329 = sadd.s32 %s327, %s328
        %s330 = smul.addr %s329, 4
        %s331 = scalar_lea.vmem %s4, %s330
      $region48: #{residual_block.5} parent=43 // pred_fallthru
        _
    $region44: #{residual_block.5} parent=5 // pred_fallthru
      _
  $region6: #{residual_block.5} parent=0 // loop_footer
    %s14 = sadd.s32 1, %s10
  $region7: #{residual_block.5} parent=0 // loop_footer_branch
    %9 = sbr.rel target = $region3
  $region8: #{residual_block.5} parent=0 // loop_exit
    _

</llo_original>
